<compile_context>
chip_gen: v5e
topology: v5e:2x2
jax: 0.10.0
libtpu: 0.0.40
codegen_flags: <defaults>
</compile_context>

<pallas_src>
import functools
import math

import jax
import jax.numpy as jnp
from jax.experimental import pallas as pl
from jax.experimental.pallas import tpu as pltpu  # noqa: F401  (kept for TPU-specific params if needed)

# ---------------- config (small, consistent with the module) ----------------
N_EMBD = 64
N_LAYER = 2
N_HEAD = 4
N_POS = 32
VOCAB = 96
VOCAB_PAD = 128          # lane-dense lm_head output; sliced back to VOCAB outside
CODEBOOK = 128
CLAP_DIM = 512
HEAD_DIM = N_EMBD // N_HEAD
LN_EPS = 1e-5
_GELU_C = math.sqrt(2.0 / math.pi)


# ---------------- in-kernel helpers (pure value functions) ----------------
def _ln(x, g, b):
    mu = jnp.mean(x, axis=-1, keepdims=True)
    var = jnp.mean(jnp.square(x - mu), axis=-1, keepdims=True)
    return (x - mu) * jax.lax.rsqrt(var + LN_EPS) * g + b


def _gelu_new(x):
    # GPT-2 "gelu_new" (tanh approximation)
    return 0.5 * x * (1.0 + jnp.tanh(_GELU_C * (x + 0.044715 * x * x * x)))


# ---------------- Pallas kernels ----------------
def _embed_kernel(clap_ref, code_ref, wc_ref, wpe_ref, o_ref, *, s_clap):
    """clap proj + concat(code embeds) + positional embedding, fused."""
    B = clap_ref.shape[0]
    E = wc_ref.shape[1]
    wpe = wpe_ref[...]                                            # (S, E)
    clap_e = jnp.dot(
        clap_ref[...].reshape(B * s_clap, -1), wc_ref[...],
        preferred_element_type=jnp.float32,
    ).reshape(B, s_clap, E)
    o_ref[:, :s_clap, :] = clap_e + wpe[:s_clap][None]
    o_ref[:, s_clap:, :] = code_ref[...] + wpe[s_clap:][None]


def _embed_kernel_nocodes(clap_ref, wc_ref, wpe_ref, o_ref, *, s_clap):
    B = clap_ref.shape[0]
    E = wc_ref.shape[1]
    clap_e = jnp.dot(
        clap_ref[...].reshape(B * s_clap, -1), wc_ref[...],
        preferred_element_type=jnp.float32,
    ).reshape(B, s_clap, E)
    o_ref[...] = clap_e + wpe_ref[...][None]


def _layer_kernel(h_ref, ln1_g, ln1_b, attn_w, attn_b, proj_w, proj_b,
                  ln2_g, ln2_b, fc_w, fc_b, fcp_w, fcp_b, o_ref):
    """One full GPT-2 block, fused: LN1 -> QKV -> causal MHA -> proj -> +res
    -> LN2 -> fc + gelu_new -> fc_proj -> +res. Everything stays in VMEM."""
    B, S, E = h_ref.shape
    H, D = N_HEAD, HEAD_DIM
    scale = 1.0 / math.sqrt(D)

    h = h_ref[...]                                                # (B, S, E)
    hf = h.reshape(B * S, E)

    # --- LN1 + fused QKV projection (lane-dense 3E output) ---
    x = _ln(hf, ln1_g[...], ln1_b[...])
    qkv = jnp.dot(x, attn_w[...], preferred_element_type=jnp.float32) + attn_b[...]
    qkv = qkv.reshape(B, S, 3 * E)

    # --- causal multi-head attention, all heads in this kernel ---
    row = jax.lax.broadcasted_iota(jnp.int32, (S, S), 0)
    col = jax.lax.broadcasted_iota(jnp.int32, (S, S), 1)
    causal = (row >= col)[None]                                   # (1, S, S)

    head_outs = []
    for hd in range(H):                                           # static unroll, H=4
        q = qkv[:, :, hd * D:(hd + 1) * D]                        # (B, S, D)
        k = qkv[:, :, E + hd * D:E + (hd + 1) * D]
        v = qkv[:, :, 2 * E + hd * D:2 * E + (hd + 1) * D]
        s = jnp.einsum("bqd,bkd->bqk", q, k,
                       preferred_element_type=jnp.float32) * scale
        s = jnp.where(causal, s, jnp.float32(-1e9))
        p = jnp.exp(s - jnp.max(s, axis=-1, keepdims=True))
        inv = pl.reciprocal(jnp.sum(p, axis=-1, keepdims=True), approx=True)
        o_h = jnp.einsum("bqk,bkd->bqd", p, v,
                         preferred_element_type=jnp.float32) * inv
        head_outs.append(o_h)
    attn = jnp.concatenate(head_outs, axis=-1).reshape(B * S, E)  # (B*S, E)

    # --- output projection + residual (fused) ---
    h1 = hf + jnp.dot(attn, proj_w[...],
                      preferred_element_type=jnp.float32) + proj_b[...]

    # --- LN2 + MLP + residual (fused) ---
    x2 = _ln(h1, ln2_g[...], ln2_b[...])
    y = jnp.dot(x2, fc_w[...], preferred_element_type=jnp.float32) + fc_b[...]
    y = _gelu_new(y)
    y = jnp.dot(y, fcp_w[...], preferred_element_type=jnp.float32) + fcp_b[...]
    o_ref[...] = (h1 + y).reshape(B, S, E)


def _final_kernel(h_ref, g_ref, b_ref, wT_ref, o_ref):
    """Final LayerNorm + tied lm_head (lane-dense, padded to VOCAB_PAD)."""
    x = _ln(h_ref[...], g_ref[...], b_ref[...])
    o_ref[...] = jnp.dot(x, wT_ref[...], preferred_element_type=jnp.float32)


# ---------------- kernel wrappers ----------------
def transformer_layer(h, layer):
    B, S, E = h.shape
    return pl.pallas_call(
        _layer_kernel,
        out_shape=jax.ShapeDtypeStruct((B, S, E), jnp.float32),
    )(
        h,
        layer["ln1_g"].reshape(1, E), layer["ln1_b"].reshape(1, E),
        layer["attn_w"], layer["attn_b"].reshape(1, 3 * E),
        layer["proj_w"], layer["proj_b"].reshape(1, E),
        layer["ln2_g"].reshape(1, E), layer["ln2_b"].reshape(1, E),
        layer["fc_w"], layer["fc_b"].reshape(1, 4 * E),
        layer["fc_proj_w"], layer["fc_proj_b"].reshape(1, E),
    )


# ---------------- deterministic parameter init ----------------
def init_params(key):
    def normal(key, shape, std=0.02):
        return (std * jax.random.normal(key, shape)).astype(jnp.float32)

    keys = iter(jax.random.split(key, 8 + N_LAYER * 8))
    wte = normal(next(keys), (VOCAB, N_EMBD))
    params = {
        "wc": normal(next(keys), (CLAP_DIM, N_EMBD)),          # nn.Linear(512, n_embd, bias=False)
        "we": normal(next(keys), (CODEBOOK, N_EMBD)),           # nn.Embedding(codebook_size, n_embd)
        "wte": wte,                                             # gpt2 token emb (tied lm_head)
        # precomputed, transposed + lane-padded tied lm_head weight (96 -> 128)
        "lm_head_t": jnp.zeros((N_EMBD, VOCAB_PAD), jnp.float32).at[:, :VOCAB].set(wte.T),
        "wpe": normal(next(keys), (N_POS, N_EMBD)),             # gpt2 positional emb
        "lnf_g": jnp.ones((N_EMBD,), jnp.float32),
        "lnf_b": jnp.zeros((N_EMBD,), jnp.float32),
        "layers": [],
    }
    for _ in range(N_LAYER):
        params["layers"].append({
            "ln1_g": jnp.ones((N_EMBD,), jnp.float32),
            "ln1_b": jnp.zeros((N_EMBD,), jnp.float32),
            "attn_w": normal(next(keys), (N_EMBD, 3 * N_EMBD)),
            "attn_b": jnp.zeros((3 * N_EMBD,), jnp.float32),
            "proj_w": normal(next(keys), (N_EMBD, N_EMBD)),
            "proj_b": jnp.zeros((N_EMBD,), jnp.float32),
            "ln2_g": jnp.ones((N_EMBD,), jnp.float32),
            "ln2_b": jnp.zeros((N_EMBD,), jnp.float32),
            "fc_w": normal(next(keys), (N_EMBD, 4 * N_EMBD)),
            "fc_b": jnp.zeros((4 * N_EMBD,), jnp.float32),
            "fc_proj_w": normal(next(keys), (4 * N_EMBD, N_EMBD)),
            "fc_proj_b": jnp.zeros((N_EMBD,), jnp.float32),
        })
    return params


# ---------------- forward ----------------
def _forward_impl(params, codes, clap_embedding):
    B, S_clap, _ = clap_embedding.shape
    S_codes = codes.shape[1] if codes.size > 0 else 0
    S = S_clap + S_codes
    assert S <= N_POS, f"sequence length {S} exceeds n_positions={N_POS}"

    clap = clap_embedding.astype(jnp.float32)
    wpe_s = params["wpe"][:S]

    # --- embeddings: clap @ wc, concat with code embeddings, + positional ---
    if S_codes > 0:
        # TODO(synk): embedding gather (nn.Embedding) kept as jnp.take in jit-fused XLA glue.
        code_embed = jnp.take(params["we"], codes, axis=0)            # (B, S_codes, E)
        h = pl.pallas_call(
            functools.partial(_embed_kernel, s_clap=S_clap),
            out_shape=jax.ShapeDtypeStruct((B, S, N_EMBD), jnp.float32),
        )(clap, code_embed, params["wc"], wpe_s)
    else:
        h = pl.pallas_call(
            functools.partial(_embed_kernel_nocodes, s_clap=S_clap),
            out_shape=jax.ShapeDtypeStruct((B, S, N_EMBD), jnp.float32),
        )(clap, params["wc"], wpe_s)

    # --- transformer layers: one fused pallas_call per layer ---
    for layer in params["layers"]:
        h = transformer_layer(h, layer)

    # --- final layernorm + tied lm_head (lane-padded), slice outside ---
    hf = h.reshape(B * S, N_EMBD)
    logits_pad = pl.pallas_call(
        _final_kernel,
        out_shape=jax.ShapeDtypeStruct((B * S, VOCAB_PAD), jnp.float32),
    )(hf, params["lnf_g"].reshape(1, N_EMBD), params["lnf_b"].reshape(1, N_EMBD),
      params["lm_head_t"])
    return logits_pad[:, :VOCAB].reshape(B, S, VOCAB)


_forward_jit = jax.jit(_forward_impl)


def circe_gpt_forward(params, codes, clap_embedding, attention_mask=None):
    # TODO(synk): attention_mask=None path only; additive HF-style padding mask not implemented.
    del attention_mask
    return _forward_jit(params, codes, clap_embedding)


if __name__ == "__main__":
    key = jax.random.PRNGKey(0)
    k_param, k_codes, k_clap = jax.random.split(key, 3)

    params = init_params(k_param)

    B, S_CLAP, S_CODES = 2, 1, 7
    codes = jax.random.randint(k_codes, (B, S_CODES), 0, CODEBOOK, dtype=jnp.int32)
    clap_embedding = jax.random.normal(k_clap, (B, S_CLAP, CLAP_DIM), dtype=jnp.float32)

    logits = circe_gpt_forward(params, codes, clap_embedding)
    jax.block_until_ready(logits)

    assert logits.shape == (B, S_CLAP + S_CODES, VOCAB)
    assert logits.dtype == jnp.float32
    print("KERNEL_OK")
</pallas_src>

<mosaic_0001>
module attributes {stable_mosaic.version = 11 : i64} {
  func.func @_embed_kernel(%arg0: memref<2x1x512xf32, #tpu.memory_space<vmem>>, %arg1: memref<2x7x64xf32, #tpu.memory_space<vmem>>, %arg2: memref<512x64xf32, #tpu.memory_space<vmem>>, %arg3: memref<8x64xf32, #tpu.memory_space<vmem>>, %arg4: memref<2x8x64xf32, #tpu.memory_space<vmem>>) attributes {dimension_semantics = [], scalar_prefetch = 0 : i64, scratch_operands = 0 : i64, tpu.core_type = #tpu.core_type<tc>} {
    %c0 = arith.constant 0 : index
    %c0_0 = arith.constant 0 : index
    %0 = vector.load %arg3[%c0, %c0_0] : memref<8x64xf32, #tpu.memory_space<vmem>>, vector<8x64xf32>
    %c0_1 = arith.constant 0 : index
    %c0_2 = arith.constant 0 : index
    %c0_3 = arith.constant 0 : index
    %1 = vector.load %arg0[%c0_1, %c0_2, %c0_3] : memref<2x1x512xf32, #tpu.memory_space<vmem>>, vector<2x1x512xf32>
    %2 = vector.shape_cast %1 : vector<2x1x512xf32> to vector<2x512xf32>
    %c0_4 = arith.constant 0 : index
    %c0_5 = arith.constant 0 : index
    %3 = vector.load %arg2[%c0_4, %c0_5] : memref<512x64xf32, #tpu.memory_space<vmem>>, vector<512x64xf32>
    %cst = arith.constant dense<0.000000e+00> : vector<2x64xf32>
    %4 = tpu.matmul %2, %3, %cst {dimension_numbers = #tpu.dot_dimension_numbers<[1], [0], [0], [1], [0, 0, 1, 1], [], []>} : vector<2x512xf32>, vector<512x64xf32>, vector<2x64xf32> -> vector<2x64xf32>
    %5 = vector.shape_cast %4 : vector<2x64xf32> to vector<2x1x64xf32>
    %6 = vector.extract_strided_slice %0 {offsets = [0, 0], sizes = [1, 64], strides = [1, 1]} : vector<8x64xf32> to vector<1x64xf32>
    %7 = vector.shape_cast %6 : vector<1x64xf32> to vector<1x1x64xf32>
    %8 = vector.broadcast %7 : vector<1x1x64xf32> to vector<2x1x64xf32>
    %9 = arith.addf %5, %8 : vector<2x1x64xf32>
    %c0_6 = arith.constant 0 : index
    %c0_7 = arith.constant 0 : index
    %c0_8 = arith.constant 0 : index
    %10 = vector.load %arg4[%c0_6, %c0_7, %c0_8] : memref<2x8x64xf32, #tpu.memory_space<vmem>>, vector<2x1x64xf32>
    tpu.vector_store %arg4[%c0_6, %c0_7, %c0_8], %9 {strides = array<i32>} : memref<2x8x64xf32, #tpu.memory_space<vmem>>, vector<2x1x64xf32>,
    %c0_9 = arith.constant 0 : index
    %c0_10 = arith.constant 0 : index
    %c0_11 = arith.constant 0 : index
    %11 = vector.load %arg1[%c0_9, %c0_10, %c0_11] : memref<2x7x64xf32, #tpu.memory_space<vmem>>, vector<2x7x64xf32>
    %12 = vector.extract_strided_slice %0 {offsets = [1, 0], sizes = [7, 64], strides = [1, 1]} : vector<8x64xf32> to vector<7x64xf32>
    %13 = vector.shape_cast %12 : vector<7x64xf32> to vector<1x7x64xf32>
    %14 = vector.broadcast %13 : vector<1x7x64xf32> to vector<2x7x64xf32>
    %15 = arith.addf %11, %14 : vector<2x7x64xf32>
    %c0_12 = arith.constant 0 : index
    %c1 = arith.constant 1 : index
    %c0_13 = arith.constant 0 : index
    %16 = vector.load %arg4[%c0_12, %c1, %c0_13] : memref<2x8x64xf32, #tpu.memory_space<vmem>>, vector<2x7x64xf32>
    tpu.vector_store %arg4[%c0_12, %c1, %c0_13], %15 {strides = array<i32>} : memref<2x8x64xf32, #tpu.memory_space<vmem>>, vector<2x7x64xf32>,
    return
  }
}

module attributes {stable_mosaic.version = 11 : i64} {
  func.func @_final_kernel(%arg0: memref<16x64xf32, #tpu.memory_space<vmem>>, %arg1: memref<1x64xf32, #tpu.memory_space<vmem>>, %arg2: memref<1x64xf32, #tpu.memory_space<vmem>>, %arg3: memref<64x128xf32, #tpu.memory_space<vmem>>, %arg4: memref<16x128xf32, #tpu.memory_space<vmem>>) attributes {dimension_semantics = [], scalar_prefetch = 0 : i64, scratch_operands = 0 : i64, tpu.core_type = #tpu.core_type<tc>} {
    %c0 = arith.constant 0 : index
    %c0_0 = arith.constant 0 : index
    %0 = vector.load %arg0[%c0, %c0_0] : memref<16x64xf32, #tpu.memory_space<vmem>>, vector<16x64xf32>
    %c0_1 = arith.constant 0 : index
    %c0_2 = arith.constant 0 : index
    %1 = vector.load %arg1[%c0_1, %c0_2] : memref<1x64xf32, #tpu.memory_space<vmem>>, vector<1x64xf32>
    %c0_3 = arith.constant 0 : index
    %c0_4 = arith.constant 0 : index
    %2 = vector.load %arg2[%c0_3, %c0_4] : memref<1x64xf32, #tpu.memory_space<vmem>>, vector<1x64xf32>
    %cst = arith.constant dense<0.000000e+00> : vector<16xf32>
    %3 = vector.multi_reduction <add>, %0, %cst [1] : vector<16x64xf32> to vector<16xf32>
    %4 = vector.shape_cast %3 : vector<16xf32> to vector<16x1xf32>
    %cst_5 = arith.constant 6.400000e+01 : f32
    %5 = vector.broadcast %cst_5 : f32 to vector<16x1xf32>
    %6 = arith.divf %4, %5 : vector<16x1xf32>
    %7 = vector.broadcast %6 : vector<16x1xf32> to vector<16x64xf32>
    %8 = arith.subf %0, %7 : vector<16x64xf32>
    %9 = arith.mulf %8, %8 : vector<16x64xf32>
    %cst_6 = arith.constant dense<0.000000e+00> : vector<16xf32>
    %10 = vector.multi_reduction <add>, %9, %cst_6 [1] : vector<16x64xf32> to vector<16xf32>
    %11 = vector.shape_cast %10 : vector<16xf32> to vector<16x1xf32>
    %cst_7 = arith.constant 6.400000e+01 : f32
    %12 = vector.broadcast %cst_7 : f32 to vector<16x1xf32>
    %13 = arith.divf %11, %12 : vector<16x1xf32>
    %14 = vector.broadcast %6 : vector<16x1xf32> to vector<16x64xf32>
    %15 = arith.subf %0, %14 : vector<16x64xf32>
    %cst_8 = arith.constant 9.99999974E-6 : f32
    %16 = vector.broadcast %cst_8 : f32 to vector<16x1xf32>
    %17 = arith.addf %13, %16 : vector<16x1xf32>
    %18 = math.rsqrt %17 : vector<16x1xf32>
    %19 = vector.broadcast %18 : vector<16x1xf32> to vector<16x64xf32>
    %20 = arith.mulf %15, %19 : vector<16x64xf32>
    %21 = vector.broadcast %1 : vector<1x64xf32> to vector<16x64xf32>
    %22 = arith.mulf %20, %21 : vector<16x64xf32>
    %23 = vector.broadcast %2 : vector<1x64xf32> to vector<16x64xf32>
    %24 = arith.addf %22, %23 : vector<16x64xf32>
    %c0_9 = arith.constant 0 : index
    %c0_10 = arith.constant 0 : index
    %25 = vector.load %arg3[%c0_9, %c0_10] : memref<64x128xf32, #tpu.memory_space<vmem>>, vector<64x128xf32>
    %cst_11 = arith.constant dense<0.000000e+00> : vector<16x128xf32>
    %26 = tpu.matmul %24, %25, %cst_11 {dimension_numbers = #tpu.dot_dimension_numbers<[1], [0], [0], [1], [0, 0, 1, 1], [], []>} : vector<16x64xf32>, vector<64x128xf32>, vector<16x128xf32> -> vector<16x128xf32>
    %c0_12 = arith.constant 0 : index
    %c0_13 = arith.constant 0 : index
    %27 = vector.load %arg4[%c0_12, %c0_13] : memref<16x128xf32, #tpu.memory_space<vmem>>, vector<16x128xf32>
    tpu.vector_store %arg4[%c0_12, %c0_13], %26 {strides = array<i32>} : memref<16x128xf32, #tpu.memory_space<vmem>>, vector<16x128xf32>,
    return
  }
}

module attributes {stable_mosaic.version = 11 : i64} {
  func.func @_layer_kernel(%arg0: memref<2x8x64xf32, #tpu.memory_space<vmem>>, %arg1: memref<1x64xf32, #tpu.memory_space<vmem>>, %arg2: memref<1x64xf32, #tpu.memory_space<vmem>>, %arg3: memref<64x192xf32, #tpu.memory_space<vmem>>, %arg4: memref<1x192xf32, #tpu.memory_space<vmem>>, %arg5: memref<64x64xf32, #tpu.memory_space<vmem>>, %arg6: memref<1x64xf32, #tpu.memory_space<vmem>>, %arg7: memref<1x64xf32, #tpu.memory_space<vmem>>, %arg8: memref<1x64xf32, #tpu.memory_space<vmem>>, %arg9: memref<64x256xf32, #tpu.memory_space<vmem>>, %arg10: memref<1x256xf32, #tpu.memory_space<vmem>>, %arg11: memref<256x64xf32, #tpu.memory_space<vmem>>, %arg12: memref<1x64xf32, #tpu.memory_space<vmem>>, %arg13: memref<2x8x64xf32, #tpu.memory_space<vmem>>) attributes {dimension_semantics = [], scalar_prefetch = 0 : i64, scratch_operands = 0 : i64, tpu.core_type = #tpu.core_type<tc>} {
    %c0 = arith.constant 0 : index
    %c0_0 = arith.constant 0 : index
    %c0_1 = arith.constant 0 : index
    %0 = vector.load %arg0[%c0, %c0_0, %c0_1] : memref<2x8x64xf32, #tpu.memory_space<vmem>>, vector<2x8x64xf32>
    %1 = vector.shape_cast %0 : vector<2x8x64xf32> to vector<16x64xf32>
    %c0_2 = arith.constant 0 : index
    %c0_3 = arith.constant 0 : index
    %2 = vector.load %arg1[%c0_2, %c0_3] : memref<1x64xf32, #tpu.memory_space<vmem>>, vector<1x64xf32>
    %c0_4 = arith.constant 0 : index
    %c0_5 = arith.constant 0 : index
    %3 = vector.load %arg2[%c0_4, %c0_5] : memref<1x64xf32, #tpu.memory_space<vmem>>, vector<1x64xf32>
    %cst = arith.constant dense<0.000000e+00> : vector<16xf32>
    %4 = vector.multi_reduction <add>, %1, %cst [1] : vector<16x64xf32> to vector<16xf32>
    %5 = vector.shape_cast %4 : vector<16xf32> to vector<16x1xf32>
    %cst_6 = arith.constant 6.400000e+01 : f32
    %6 = vector.broadcast %cst_6 : f32 to vector<16x1xf32>
    %7 = arith.divf %5, %6 : vector<16x1xf32>
    %8 = vector.broadcast %7 : vector<16x1xf32> to vector<16x64xf32>
    %9 = arith.subf %1, %8 : vector<16x64xf32>
    %10 = arith.mulf %9, %9 : vector<16x64xf32>
    %cst_7 = arith.constant dense<0.000000e+00> : vector<16xf32>
    %11 = vector.multi_reduction <add>, %10, %cst_7 [1] : vector<16x64xf32> to vector<16xf32>
    %12 = vector.shape_cast %11 : vector<16xf32> to vector<16x1xf32>
    %cst_8 = arith.constant 6.400000e+01 : f32
    %13 = vector.broadcast %cst_8 : f32 to vector<16x1xf32>
    %14 = arith.divf %12, %13 : vector<16x1xf32>
    %15 = vector.broadcast %7 : vector<16x1xf32> to vector<16x64xf32>
    %16 = arith.subf %1, %15 : vector<16x64xf32>
    %cst_9 = arith.constant 9.99999974E-6 : f32
    %17 = vector.broadcast %cst_9 : f32 to vector<16x1xf32>
    %18 = arith.addf %14, %17 : vector<16x1xf32>
    %19 = math.rsqrt %18 : vector<16x1xf32>
    %20 = vector.broadcast %19 : vector<16x1xf32> to vector<16x64xf32>
    %21 = arith.mulf %16, %20 : vector<16x64xf32>
    %22 = vector.broadcast %2 : vector<1x64xf32> to vector<16x64xf32>
    %23 = arith.mulf %21, %22 : vector<16x64xf32>
    %24 = vector.broadcast %3 : vector<1x64xf32> to vector<16x64xf32>
    %25 = arith.addf %23, %24 : vector<16x64xf32>
    %c0_10 = arith.constant 0 : index
    %c0_11 = arith.constant 0 : index
    %26 = vector.load %arg3[%c0_10, %c0_11] : memref<64x192xf32, #tpu.memory_space<vmem>>, vector<64x192xf32>
    %cst_12 = arith.constant dense<0.000000e+00> : vector<16x192xf32>
    %27 = tpu.matmul %25, %26, %cst_12 {dimension_numbers = #tpu.dot_dimension_numbers<[1], [0], [0], [1], [0, 0, 1, 1], [], []>} : vector<16x64xf32>, vector<64x192xf32>, vector<16x192xf32> -> vector<16x192xf32>
    %c0_13 = arith.constant 0 : index
    %c0_14 = arith.constant 0 : index
    %28 = vector.load %arg4[%c0_13, %c0_14] : memref<1x192xf32, #tpu.memory_space<vmem>>, vector<1x192xf32>
    %29 = vector.broadcast %28 : vector<1x192xf32> to vector<16x192xf32>
    %30 = arith.addf %27, %29 : vector<16x192xf32>
    %31 = vector.shape_cast %30 : vector<16x192xf32> to vector<2x8x192xf32>
    %32 = tpu.iota {dimensions = array<i32: 0>} : vector<8x8xi32>
    %33 = tpu.iota {dimensions = array<i32: 1>} : vector<8x8xi32>
    %34 = arith.cmpi sge, %32, %33 : vector<8x8xi32>
    %35 = vector.shape_cast %34 : vector<8x8xi1> to vector<1x8x8xi1>
    %36 = vector.extract_strided_slice %31 {offsets = [0, 0, 0], sizes = [2, 8, 16], strides = [1, 1, 1]} : vector<2x8x192xf32> to vector<2x8x16xf32>
    %37 = vector.extract_strided_slice %31 {offsets = [0, 0, 64], sizes = [2, 8, 16], strides = [1, 1, 1]} : vector<2x8x192xf32> to vector<2x8x16xf32>
    %38 = vector.extract_strided_slice %31 {offsets = [0, 0, 128], sizes = [2, 8, 16], strides = [1, 1, 1]} : vector<2x8x192xf32> to vector<2x8x16xf32>
    "tpu.trace_start"() <{level = 10 : i32, message = "bqd,bkd->bqk"}> : () -> ()
    %cst_15 = arith.constant dense<0.000000e+00> : vector<2x8x8xf32>
    %39 = tpu.matmul %36, %37, %cst_15 {dimension_numbers = #tpu.dot_dimension_numbers<[2], [2], [1], [1], [0, 0, 0, 1, 1, 1], [0], [0]>} : vector<2x8x16xf32>, vector<2x8x16xf32>, vector<2x8x8xf32> -> vector<2x8x8xf32>
    "tpu.trace_stop"() : () -> ()
    %cst_16 = arith.constant 2.500000e-01 : f32
    %40 = vector.broadcast %cst_16 : f32 to vector<2x8x8xf32>
    %41 = arith.mulf %39, %40 : vector<2x8x8xf32>
    %cst_17 = arith.constant -1.000000e+09 : f32
    %42 = vector.shape_cast %35 : vector<1x8x8xi1> to vector<1x8x8xi1>
    %43 = vector.broadcast %42 : vector<1x8x8xi1> to vector<2x8x8xi1>
    %44 = vector.broadcast %cst_17 : f32 to vector<2x8x8xf32>
    %45 = arith.select %43, %41, %44 : vector<2x8x8xi1>, vector<2x8x8xf32>
    %cst_18 = arith.constant dense<0xFF800000> : vector<2x8xf32>
    %46 = vector.multi_reduction <maximumf>, %45, %cst_18 [2] : vector<2x8x8xf32> to vector<2x8xf32>
    %47 = vector.shape_cast %46 : vector<2x8xf32> to vector<2x8x1xf32>
    %48 = vector.broadcast %47 : vector<2x8x1xf32> to vector<2x8x8xf32>
    %49 = arith.subf %45, %48 : vector<2x8x8xf32>
    %50 = math.exp %49 : vector<2x8x8xf32>
    %cst_19 = arith.constant dense<0.000000e+00> : vector<2x8xf32>
    %51 = vector.multi_reduction <add>, %50, %cst_19 [2] : vector<2x8x8xf32> to vector<2x8xf32>
    %52 = vector.shape_cast %51 : vector<2x8xf32> to vector<2x8x1xf32>
    %53 = tpu.reciprocal %52 {approx = true} : vector<2x8x1xf32> -> vector<2x8x1xf32>
    "tpu.trace_start"() <{level = 10 : i32, message = "bqk,bkd->bqd"}> : () -> ()
    %cst_20 = arith.constant dense<0.000000e+00> : vector<2x8x16xf32>
    %54 = tpu.matmul %50, %38, %cst_20 {dimension_numbers = #tpu.dot_dimension_numbers<[2], [1], [1], [2], [0, 0, 0, 1, 1, 2], [0], [0]>} : vector<2x8x8xf32>, vector<2x8x16xf32>, vector<2x8x16xf32> -> vector<2x8x16xf32>
    "tpu.trace_stop"() : () -> ()
    %55 = vector.broadcast %53 : vector<2x8x1xf32> to vector<2x8x16xf32>
    %56 = arith.mulf %54, %55 : vector<2x8x16xf32>
    %57 = vector.extract_strided_slice %31 {offsets = [0, 0, 16], sizes = [2, 8, 16], strides = [1, 1, 1]} : vector<2x8x192xf32> to vector<2x8x16xf32>
    %58 = vector.extract_strided_slice %31 {offsets = [0, 0, 80], sizes = [2, 8, 16], strides = [1, 1, 1]} : vector<2x8x192xf32> to vector<2x8x16xf32>
    %59 = vector.extract_strided_slice %31 {offsets = [0, 0, 144], sizes = [2, 8, 16], strides = [1, 1, 1]} : vector<2x8x192xf32> to vector<2x8x16xf32>
    "tpu.trace_start"() <{level = 10 : i32, message = "bqd,bkd->bqk"}> : () -> ()
    %cst_21 = arith.constant dense<0.000000e+00> : vector<2x8x8xf32>
    %60 = tpu.matmul %57, %58, %cst_21 {dimension_numbers = #tpu.dot_dimension_numbers<[2], [2], [1], [1], [0, 0, 0, 1, 1, 1], [0], [0]>} : vector<2x8x16xf32>, vector<2x8x16xf32>, vector<2x8x8xf32> -> vector<2x8x8xf32>
    "tpu.trace_stop"() : () -> ()
    %cst_22 = arith.constant 2.500000e-01 : f32
    %61 = vector.broadcast %cst_22 : f32 to vector<2x8x8xf32>
    %62 = arith.mulf %60, %61 : vector<2x8x8xf32>
    %cst_23 = arith.constant -1.000000e+09 : f32
    %63 = vector.shape_cast %35 : vector<1x8x8xi1> to vector<1x8x8xi1>
    %64 = vector.broadcast %63 : vector<1x8x8xi1> to vector<2x8x8xi1>
    %65 = vector.broadcast %cst_23 : f32 to vector<2x8x8xf32>
    %66 = arith.select %64, %62, %65 : vector<2x8x8xi1>, vector<2x8x8xf32>
    %cst_24 = arith.constant dense<0xFF800000> : vector<2x8xf32>
    %67 = vector.multi_reduction <maximumf>, %66, %cst_24 [2] : vector<2x8x8xf32> to vector<2x8xf32>
    %68 = vector.shape_cast %67 : vector<2x8xf32> to vector<2x8x1xf32>
    %69 = vector.broadcast %68 : vector<2x8x1xf32> to vector<2x8x8xf32>
    %70 = arith.subf %66, %69 : vector<2x8x8xf32>
    %71 = math.exp %70 : vector<2x8x8xf32>
    %cst_25 = arith.constant dense<0.000000e+00> : vector<2x8xf32>
    %72 = vector.multi_reduction <add>, %71, %cst_25 [2] : vector<2x8x8xf32> to vector<2x8xf32>
    %73 = vector.shape_cast %72 : vector<2x8xf32> to vector<2x8x1xf32>
    %74 = tpu.reciprocal %73 {approx = true} : vector<2x8x1xf32> -> vector<2x8x1xf32>
    "tpu.trace_start"() <{level = 10 : i32, message = "bqk,bkd->bqd"}> : () -> ()
    %cst_26 = arith.constant dense<0.000000e+00> : vector<2x8x16xf32>
    %75 = tpu.matmul %71, %59, %cst_26 {dimension_numbers = #tpu.dot_dimension_numbers<[2], [1], [1], [2], [0, 0, 0, 1, 1, 2], [0], [0]>} : vector<2x8x8xf32>, vector<2x8x16xf32>, vector<2x8x16xf32> -> vector<2x8x16xf32>
    "tpu.trace_stop"() : () -> ()
    %76 = vector.broadcast %74 : vector<2x8x1xf32> to vector<2x8x16xf32>
    %77 = arith.mulf %75, %76 : vector<2x8x16xf32>
    %78 = vector.extract_strided_slice %31 {offsets = [0, 0, 32], sizes = [2, 8, 16], strides = [1, 1, 1]} : vector<2x8x192xf32> to vector<2x8x16xf32>
    %79 = vector.extract_strided_slice %31 {offsets = [0, 0, 96], sizes = [2, 8, 16], strides = [1, 1, 1]} : vector<2x8x192xf32> to vector<2x8x16xf32>
    %80 = vector.extract_strided_slice %31 {offsets = [0, 0, 160], sizes = [2, 8, 16], strides = [1, 1, 1]} : vector<2x8x192xf32> to vector<2x8x16xf32>
    "tpu.trace_start"() <{level = 10 : i32, message = "bqd,bkd->bqk"}> : () -> ()
    %cst_27 = arith.constant dense<0.000000e+00> : vector<2x8x8xf32>
    %81 = tpu.matmul %78, %79, %cst_27 {dimension_numbers = #tpu.dot_dimension_numbers<[2], [2], [1], [1], [0, 0, 0, 1, 1, 1], [0], [0]>} : vector<2x8x16xf32>, vector<2x8x16xf32>, vector<2x8x8xf32> -> vector<2x8x8xf32>
    "tpu.trace_stop"() : () -> ()
    %cst_28 = arith.constant 2.500000e-01 : f32
    %82 = vector.broadcast %cst_28 : f32 to vector<2x8x8xf32>
    %83 = arith.mulf %81, %82 : vector<2x8x8xf32>
    %cst_29 = arith.constant -1.000000e+09 : f32
    %84 = vector.shape_cast %35 : vector<1x8x8xi1> to vector<1x8x8xi1>
    %85 = vector.broadcast %84 : vector<1x8x8xi1> to vector<2x8x8xi1>
    %86 = vector.broadcast %cst_29 : f32 to vector<2x8x8xf32>
    %87 = arith.select %85, %83, %86 : vector<2x8x8xi1>, vector<2x8x8xf32>
    %cst_30 = arith.constant dense<0xFF800000> : vector<2x8xf32>
    %88 = vector.multi_reduction <maximumf>, %87, %cst_30 [2] : vector<2x8x8xf32> to vector<2x8xf32>
    %89 = vector.shape_cast %88 : vector<2x8xf32> to vector<2x8x1xf32>
    %90 = vector.broadcast %89 : vector<2x8x1xf32> to vector<2x8x8xf32>
    %91 = arith.subf %87, %90 : vector<2x8x8xf32>
    %92 = math.exp %91 : vector<2x8x8xf32>
    %cst_31 = arith.constant dense<0.000000e+00> : vector<2x8xf32>
    %93 = vector.multi_reduction <add>, %92, %cst_31 [2] : vector<2x8x8xf32> to vector<2x8xf32>
    %94 = vector.shape_cast %93 : vector<2x8xf32> to vector<2x8x1xf32>
    %95 = tpu.reciprocal %94 {approx = true} : vector<2x8x1xf32> -> vector<2x8x1xf32>
    "tpu.trace_start"() <{level = 10 : i32, message = "bqk,bkd->bqd"}> : () -> ()
    %cst_32 = arith.constant dense<0.000000e+00> : vector<2x8x16xf32>
    %96 = tpu.matmul %92, %80, %cst_32 {dimension_numbers = #tpu.dot_dimension_numbers<[2], [1], [1], [2], [0, 0, 0, 1, 1, 2], [0], [0]>} : vector<2x8x8xf32>, vector<2x8x16xf32>, vector<2x8x16xf32> -> vector<2x8x16xf32>
    "tpu.trace_stop"() : () -> ()
    %97 = vector.broadcast %95 : vector<2x8x1xf32> to vector<2x8x16xf32>
    %98 = arith.mulf %96, %97 : vector<2x8x16xf32>
    %99 = vector.extract_strided_slice %31 {offsets = [0, 0, 48], sizes = [2, 8, 16], strides = [1, 1, 1]} : vector<2x8x192xf32> to vector<2x8x16xf32>
    %100 = vector.extract_strided_slice %31 {offsets = [0, 0, 112], sizes = [2, 8, 16], strides = [1, 1, 1]} : vector<2x8x192xf32> to vector<2x8x16xf32>
    %101 = vector.extract_strided_slice %31 {offsets = [0, 0, 176], sizes = [2, 8, 16], strides = [1, 1, 1]} : vector<2x8x192xf32> to vector<2x8x16xf32>
    "tpu.trace_start"() <{level = 10 : i32, message = "bqd,bkd->bqk"}> : () -> ()
    %cst_33 = arith.constant dense<0.000000e+00> : vector<2x8x8xf32>
    %102 = tpu.matmul %99, %100, %cst_33 {dimension_numbers = #tpu.dot_dimension_numbers<[2], [2], [1], [1], [0, 0, 0, 1, 1, 1], [0], [0]>} : vector<2x8x16xf32>, vector<2x8x16xf32>, vector<2x8x8xf32> -> vector<2x8x8xf32>
    "tpu.trace_stop"() : () -> ()
    %cst_34 = arith.constant 2.500000e-01 : f32
    %103 = vector.broadcast %cst_34 : f32 to vector<2x8x8xf32>
    %104 = arith.mulf %102, %103 : vector<2x8x8xf32>
    %cst_35 = arith.constant -1.000000e+09 : f32
    %105 = vector.shape_cast %35 : vector<1x8x8xi1> to vector<1x8x8xi1>
    %106 = vector.broadcast %105 : vector<1x8x8xi1> to vector<2x8x8xi1>
    %107 = vector.broadcast %cst_35 : f32 to vector<2x8x8xf32>
    %108 = arith.select %106, %104, %107 : vector<2x8x8xi1>, vector<2x8x8xf32>
    %cst_36 = arith.constant dense<0xFF800000> : vector<2x8xf32>
    %109 = vector.multi_reduction <maximumf>, %108, %cst_36 [2] : vector<2x8x8xf32> to vector<2x8xf32>
    %110 = vector.shape_cast %109 : vector<2x8xf32> to vector<2x8x1xf32>
    %111 = vector.broadcast %110 : vector<2x8x1xf32> to vector<2x8x8xf32>
    %112 = arith.subf %108, %111 : vector<2x8x8xf32>
    %113 = math.exp %112 : vector<2x8x8xf32>
    %cst_37 = arith.constant dense<0.000000e+00> : vector<2x8xf32>
    %114 = vector.multi_reduction <add>, %113, %cst_37 [2] : vector<2x8x8xf32> to vector<2x8xf32>
    %115 = vector.shape_cast %114 : vector<2x8xf32> to vector<2x8x1xf32>
    %116 = tpu.reciprocal %115 {approx = true} : vector<2x8x1xf32> -> vector<2x8x1xf32>
    "tpu.trace_start"() <{level = 10 : i32, message = "bqk,bkd->bqd"}> : () -> ()
    %cst_38 = arith.constant dense<0.000000e+00> : vector<2x8x16xf32>
    %117 = tpu.matmul %113, %101, %cst_38 {dimension_numbers = #tpu.dot_dimension_numbers<[2], [1], [1], [2], [0, 0, 0, 1, 1, 2], [0], [0]>} : vector<2x8x8xf32>, vector<2x8x16xf32>, vector<2x8x16xf32> -> vector<2x8x16xf32>
    "tpu.trace_stop"() : () -> ()
    %118 = vector.broadcast %116 : vector<2x8x1xf32> to vector<2x8x16xf32>
    %119 = arith.mulf %117, %118 : vector<2x8x16xf32>
    %120 = tpu.concatenate %56, %77, %98, %119 in 2 : vector<2x8x16xf32>, vector<2x8x16xf32>, vector<2x8x16xf32>, vector<2x8x16xf32> -> vector<2x8x64xf32>
    %121 = vector.shape_cast %120 : vector<2x8x64xf32> to vector<16x64xf32>
    %c0_39 = arith.constant 0 : index
    %c0_40 = arith.constant 0 : index
    %122 = vector.load %arg5[%c0_39, %c0_40] : memref<64x64xf32, #tpu.memory_space<vmem>>, vector<64x64xf32>
    %cst_41 = arith.constant dense<0.000000e+00> : vector<16x64xf32>
    %123 = tpu.matmul %121, %122, %cst_41 {dimension_numbers = #tpu.dot_dimension_numbers<[1], [0], [0], [1], [0, 0, 1, 1], [], []>} : vector<16x64xf32>, vector<64x64xf32>, vector<16x64xf32> -> vector<16x64xf32>
    %124 = arith.addf %1, %123 : vector<16x64xf32>
    %c0_42 = arith.constant 0 : index
    %c0_43 = arith.constant 0 : index
    %125 = vector.load %arg6[%c0_42, %c0_43] : memref<1x64xf32, #tpu.memory_space<vmem>>, vector<1x64xf32>
    %126 = vector.broadcast %125 : vector<1x64xf32> to vector<16x64xf32>
    %127 = arith.addf %124, %126 : vector<16x64xf32>
    %c0_44 = arith.constant 0 : index
    %c0_45 = arith.constant 0 : index
    %128 = vector.load %arg7[%c0_44, %c0_45] : memref<1x64xf32, #tpu.memory_space<vmem>>, vector<1x64xf32>
    %c0_46 = arith.constant 0 : index
    %c0_47 = arith.constant 0 : index
    %129 = vector.load %arg8[%c0_46, %c0_47] : memref<1x64xf32, #tpu.memory_space<vmem>>, vector<1x64xf32>
    %cst_48 = arith.constant dense<0.000000e+00> : vector<16xf32>
    %130 = vector.multi_reduction <add>, %127, %cst_48 [1] : vector<16x64xf32> to vector<16xf32>
    %131 = vector.shape_cast %130 : vector<16xf32> to vector<16x1xf32>
    %cst_49 = arith.constant 6.400000e+01 : f32
    %132 = vector.broadcast %cst_49 : f32 to vector<16x1xf32>
    %133 = arith.divf %131, %132 : vector<16x1xf32>
    %134 = vector.broadcast %133 : vector<16x1xf32> to vector<16x64xf32>
    %135 = arith.subf %127, %134 : vector<16x64xf32>
    %136 = arith.mulf %135, %135 : vector<16x64xf32>
    %cst_50 = arith.constant dense<0.000000e+00> : vector<16xf32>
    %137 = vector.multi_reduction <add>, %136, %cst_50 [1] : vector<16x64xf32> to vector<16xf32>
    %138 = vector.shape_cast %137 : vector<16xf32> to vector<16x1xf32>
    %cst_51 = arith.constant 6.400000e+01 : f32
    %139 = vector.broadcast %cst_51 : f32 to vector<16x1xf32>
    %140 = arith.divf %138, %139 : vector<16x1xf32>
    %141 = vector.broadcast %133 : vector<16x1xf32> to vector<16x64xf32>
    %142 = arith.subf %127, %141 : vector<16x64xf32>
    %cst_52 = arith.constant 9.99999974E-6 : f32
    %143 = vector.broadcast %cst_52 : f32 to vector<16x1xf32>
    %144 = arith.addf %140, %143 : vector<16x1xf32>
    %145 = math.rsqrt %144 : vector<16x1xf32>
    %146 = vector.broadcast %145 : vector<16x1xf32> to vector<16x64xf32>
    %147 = arith.mulf %142, %146 : vector<16x64xf32>
    %148 = vector.broadcast %128 : vector<1x64xf32> to vector<16x64xf32>
    %149 = arith.mulf %147, %148 : vector<16x64xf32>
    %150 = vector.broadcast %129 : vector<1x64xf32> to vector<16x64xf32>
    %151 = arith.addf %149, %150 : vector<16x64xf32>
    %c0_53 = arith.constant 0 : index
    %c0_54 = arith.constant 0 : index
    %152 = vector.load %arg9[%c0_53, %c0_54] : memref<64x256xf32, #tpu.memory_space<vmem>>, vector<64x256xf32>
    %cst_55 = arith.constant dense<0.000000e+00> : vector<16x256xf32>
    %153 = tpu.matmul %151, %152, %cst_55 {dimension_numbers = #tpu.dot_dimension_numbers<[1], [0], [0], [1], [0, 0, 1, 1], [], []>} : vector<16x64xf32>, vector<64x256xf32>, vector<16x256xf32> -> vector<16x256xf32>
    %c0_56 = arith.constant 0 : index
    %c0_57 = arith.constant 0 : index
    %154 = vector.load %arg10[%c0_56, %c0_57] : memref<1x256xf32, #tpu.memory_space<vmem>>, vector<1x256xf32>
    %155 = vector.broadcast %154 : vector<1x256xf32> to vector<16x256xf32>
    %156 = arith.addf %153, %155 : vector<16x256xf32>
    %cst_58 = arith.constant 5.000000e-01 : f32
    %157 = vector.broadcast %cst_58 : f32 to vector<16x256xf32>
    %158 = arith.mulf %157, %156 : vector<16x256xf32>
    %cst_59 = arith.constant 4.471500e-02 : f32
    %159 = vector.broadcast %cst_59 : f32 to vector<16x256xf32>
    %160 = arith.mulf %159, %156 : vector<16x256xf32>
    %161 = arith.mulf %160, %156 : vector<16x256xf32>
    %162 = arith.mulf %161, %156 : vector<16x256xf32>
    %163 = arith.addf %156, %162 : vector<16x256xf32>
    %cst_60 = arith.constant 0.797884583 : f32
    %164 = vector.broadcast %cst_60 : f32 to vector<16x256xf32>
    %165 = arith.mulf %164, %163 : vector<16x256xf32>
    %166 = math.tanh %165 : vector<16x256xf32>
    %cst_61 = arith.constant 1.000000e+00 : f32
    %167 = vector.broadcast %cst_61 : f32 to vector<16x256xf32>
    %168 = arith.addf %167, %166 : vector<16x256xf32>
    %169 = arith.mulf %158, %168 : vector<16x256xf32>
    %c0_62 = arith.constant 0 : index
    %c0_63 = arith.constant 0 : index
    %170 = vector.load %arg11[%c0_62, %c0_63] : memref<256x64xf32, #tpu.memory_space<vmem>>, vector<256x64xf32>
    %cst_64 = arith.constant dense<0.000000e+00> : vector<16x64xf32>
    %171 = tpu.matmul %169, %170, %cst_64 {dimension_numbers = #tpu.dot_dimension_numbers<[1], [0], [0], [1], [0, 0, 1, 1], [], []>} : vector<16x256xf32>, vector<256x64xf32>, vector<16x64xf32> -> vector<16x64xf32>
    %c0_65 = arith.constant 0 : index
    %c0_66 = arith.constant 0 : index
    %172 = vector.load %arg12[%c0_65, %c0_66] : memref<1x64xf32, #tpu.memory_space<vmem>>, vector<1x64xf32>
    %173 = vector.broadcast %172 : vector<1x64xf32> to vector<16x64xf32>
    %174 = arith.addf %171, %173 : vector<16x64xf32>
    %175 = arith.addf %127, %174 : vector<16x64xf32>
    %176 = vector.shape_cast %175 : vector<16x64xf32> to vector<2x8x64xf32>
    %c0_67 = arith.constant 0 : index
    %c0_68 = arith.constant 0 : index
    %c0_69 = arith.constant 0 : index
    %177 = vector.load %arg13[%c0_67, %c0_68, %c0_69] : memref<2x8x64xf32, #tpu.memory_space<vmem>>, vector<2x8x64xf32>
    tpu.vector_store %arg13[%c0_67, %c0_68, %c0_69], %176 {strides = array<i32>} : memref<2x8x64xf32, #tpu.memory_space<vmem>>, vector<2x8x64xf32>,
    return
  }
}

</mosaic_0001>

<llo_original>
// kernel: _forward_impl.7
$region0: #{_forward_impl.7}
  #allocation0 [shape = 'u32[]', space=smem, size = 0x4, offset = 0x4, fixed_abs, tag = 'smem constant byte address 0x4 - core index']
  #allocation1 [shape = 'u32[72,128]{1,0:T(1,128)}', space=vmem, size = 0x9000, scoped, tag = 'internal scratch']
  %s0 = inlined_call_operand.vmem [shape: f32[16,64], index: 0, kind: input, shape index: {}]
  %s1 = inlined_call_operand.vmem [shape: f32[1,64], index: 1, kind: input, shape index: {}]
  %s2 = inlined_call_operand.vmem [shape: f32[1,64], index: 2, kind: input, shape index: {}]
  %s3 = inlined_call_operand.vmem [shape: f32[64,128], index: 3, kind: input, shape index: {}]
  %s4 = inlined_call_operand.vmem [shape: f32[16,128], index: 4, kind: output, shape index: {}]
  %s5 = sld [smem:[#allocation0]]
  $region26: #{_forward_impl.7} parent=0
    _
  %s7 = ssub.s32 1, %s5
  %s8 = scalar_select 0, %s7, %s5
  // Predicated region
  $region2: #{_forward_impl.7} parent=0 // pred_check
    _
  $region3: #{_forward_impl.7} parent=0 // pred_check_branch
    %10 = sbr.rel (0) target = $region5
  $region4: #{_forward_impl.7} parent=0 // pred_region
    _
  $region5: #{_forward_impl.7} parent=0 // pred_fallthru
    _
  // Predicated region
  $region6: #{_forward_impl.7} parent=0 // pred_check
    _
  $region7: #{_forward_impl.7} parent=0 // pred_check_branch
    %12 = sbr.rel (0) target = $region9
  $region8: #{_forward_impl.7} parent=0 // pred_region
    _
  $region9: #{_forward_impl.7} parent=0 // pred_fallthru
    _
  // Predicated region
  $region10: #{_forward_impl.7} parent=0 // pred_check
    _
  $region11: #{_forward_impl.7} parent=0 // pred_check_branch
    %14 = sbr.rel (0) target = $region13
  $region12: #{_forward_impl.7} parent=0 // pred_region
    _
  $region13: #{_forward_impl.7} parent=0 // pred_fallthru
    _
  // Predicated region
  $region14: #{_forward_impl.7} parent=0 // pred_check
    _
  $region15: #{_forward_impl.7} parent=0 // pred_check_branch
    %16 = sbr.rel (0) target = $region17
  $region16: #{_forward_impl.7} parent=0 // pred_region
    _
  $region17: #{_forward_impl.7} parent=0 // pred_fallthru
    _
  %v17 = vld [vmem:[%s0] sm:$0xff]
  %v18 = vld [vmem:[%s0 + $0x8] sm:$0xff]
  %v19 = vld [vmem:[%s1] sm:$0x1]
  %v20 = vld [vmem:[%s2] sm:$0x1]
  %vm21 = vcmask 523264
  %v22 = vsel %vm21, %v17, 0.0
  %23 = vadd.xlane.f32.xlu0 %v22
  %v24 = vpop.xlane.xlu0 %23
  %v25 = vsel %vm21, %v18, 0.0
  %26 = vadd.xlane.f32.xlu0 %v25
  %v27 = vpop.xlane.xlu0 %26
  %v28 = vrcp.pop 64.0
  %v29 = vmul.f32 64.0, %v28
  %v30 = vsub.f32 1.0, %v29
  %v31 = vmul.f32 %v28, %v30
  %v32 = vadd.f32 %v28, %v31
  %vm33 = vweird.f32 %v28
  %v34 = vsel %vm33, %v28, %v32
  %v35 = vmul.f32 %v24, %v34
  %v36 = vmul.f32 %v27, %v34
  %v37 = vsub.f32 %v17, %v35
  %v38 = vsub.f32 %v18, %v36
  %v39 = vmul.f32 %v37, %v37
  %v40 = vmul.f32 %v38, %v38
  %v41 = vsel %vm21, %v39, 0.0
  %42 = vadd.xlane.f32.xlu0 %v41
  %v43 = vpop.xlane.xlu0 %42
  %v44 = vsel %vm21, %v40, 0.0
  %45 = vadd.xlane.f32.xlu0 %v44
  %v46 = vpop.xlane.xlu0 %45
  %v47 = vmul.f32 %v43, %v34
  %v48 = vmul.f32 %v46, %v34
  %v49 = vadd.f32 %v47, 1e-05
  %v50 = vadd.f32 %v48, 1e-05
  %v51 = vrsqrt.pop %v49
  %v52 = vmul.f32 %v51, %v49
  %v53 = vmul.f32 %v52, %v51
  %v54 = vmul.f32 0.5, %v53
  %v55 = vsub.f32 1.5, %v54
  %v56 = vmul.f32 %v51, %v55
  %vm57 = vweird.f32 %v49
  %vm58 = vweird.f32 %v51
  %vm59 = vmor %vm57, %vm58
  %v60 = vsel %vm59, %v51, %v56
  %v61 = vrsqrt.pop %v50
  %v62 = vmul.f32 %v61, %v50
  %v63 = vmul.f32 %v62, %v61
  %v64 = vmul.f32 0.5, %v63
  %v65 = vsub.f32 1.5, %v64
  %v66 = vmul.f32 %v61, %v65
  %vm67 = vweird.f32 %v50
  %vm68 = vweird.f32 %v61
  %vm69 = vmor %vm67, %vm68
  %v70 = vsel %vm69, %v61, %v66
  %v71 = vmul.f32 %v37, %v60
  %v72 = vmul.f32 %v38, %v70
  %v74 = vperm.slane %v19, 0
  %v76 = vmul.f32 %v71, %v74
  %v77 = vmul.f32 %v72, %v74
  %v79 = vperm.slane %v20, 0
  %v81 = vadd.f32 %v76, %v79
  %v82 = vadd.f32 %v77, %v79
  %v83 = vld [vmem:[%s3] sm:$0xff]
  %v84 = vld [vmem:[%s3 + $0x8] sm:$0xff]
  %v85 = vld [vmem:[%s3 + $0x10] sm:$0xff]
  %v86 = vld [vmem:[%s3 + $0x18] sm:$0xff]
  %v87 = vld [vmem:[%s3 + $0x20] sm:$0xff]
  %v88 = vld [vmem:[%s3 + $0x28] sm:$0xff]
  %v89 = vld [vmem:[%s3 + $0x30] sm:$0xff]
  %v90 = vld [vmem:[%s3 + $0x38] sm:$0xff]
  %v92 = vsel %vm21, %v81, 0
  %v95 = vsel %vm21, %v82, 0
  %97 = vmatpush.msra.mxu0 0.0
  %98 = vmatpush.msra.mxu0 0.0
  %99 = vmatpush.msra.mxu0 0.0
  %100 = vmatpush.msra.mxu0 0.0
  %101 = vmatpush.msra.mxu0 0.0
  %102 = vmatpush.msra.mxu0 0.0
  %103 = vmatpush.msra.mxu0 0.0
  %104 = vmatpush.msra.mxu0 0.0
  %105 = vmatpush.msra.mxu0 %v90
  %106 = vmatpush.msra.mxu0 %v89
  %107 = vmatpush.msra.mxu0 %v88
  %108 = vmatpush.msra.mxu0 %v87
  %109 = vmatpush.msra.mxu0 %v86
  %110 = vmatpush.msra.mxu0 %v85
  %111 = vmatpush.msra.mxu0 %v84
  %112 = vmatpush.msra.mxu0 %v83
  %113 = vmatmul.f32.gmra.mxu0 %v92
  %v114 = vpop.f32.mrf.mxu0
  %v115 = vadd.f32 0.0, %v114
  %116 = vmatmul.f32.gmra.mxu0 %v95
  %v117 = vpop.f32.mrf.mxu0
  %v118 = vadd.f32 0.0, %v117
  %119 = vdwg.mxu0
  %120 = vst [vmem:[%s4] sm:$0xff] %v115
  %121 = vst [vmem:[%s4 + $0x8] sm:$0xff] %v118
  // Predicated region
  $region18: #{_forward_impl.7} parent=0 // pred_check
    _
  $region19: #{_forward_impl.7} parent=0 // pred_check_branch
    %123 = sbr.rel (0) target = $region21
  $region20: #{_forward_impl.7} parent=0 // pred_region
    _
  $region21: #{_forward_impl.7} parent=0 // pred_fallthru
    _
  // Predicated region
  $region22: #{_forward_impl.7} parent=0 // pred_check
    _
  $region23: #{_forward_impl.7} parent=0 // pred_check_branch
    %125 = sbr.rel (0) target = $region25
  $region24: #{_forward_impl.7} parent=0 // pred_region
    _
  $region25: #{_forward_impl.7} parent=0 // pred_fallthru
    _

// kernel: _forward_impl.4
$region0: #{_forward_impl.4}
  #allocation0 [shape = 'u32[]', space=smem, size = 0x4, offset = 0x4, fixed_abs, tag = 'smem constant byte address 0x4 - core index']
  #allocation1 [shape = 'u32[72,128]{1,0:T(1,128)}', space=vmem, size = 0x9000, scoped, tag = 'internal scratch']
  %s0 = inlined_call_operand.vmem [shape: f32[2,1,512], index: 0, kind: input, shape index: {}]
  %s1 = inlined_call_operand.vmem [shape: f32[2,7,64], index: 1, kind: input, shape index: {}]
  %s2 = inlined_call_operand.vmem [shape: f32[512,64], index: 2, kind: input, shape index: {}]
  %s3 = inlined_call_operand.vmem [shape: f32[8,64], index: 3, kind: input, shape index: {}]
  %s4 = inlined_call_operand.vmem [shape: f32[2,8,64], index: 4, kind: output, shape index: {}]
  %s5 = sld [smem:[#allocation0]]
  $region26: #{_forward_impl.4} parent=0
    _
  %s7 = ssub.s32 1, %s5
  %s8 = scalar_select 0, %s7, %s5
  // Predicated region
  $region2: #{_forward_impl.4} parent=0 // pred_check
    _
  $region3: #{_forward_impl.4} parent=0 // pred_check_branch
    %10 = sbr.rel (0) target = $region5
  $region4: #{_forward_impl.4} parent=0 // pred_region
    _
  $region5: #{_forward_impl.4} parent=0 // pred_fallthru
    _
  // Predicated region
  $region6: #{_forward_impl.4} parent=0 // pred_check
    _
  $region7: #{_forward_impl.4} parent=0 // pred_check_branch
    %12 = sbr.rel (0) target = $region9
  $region8: #{_forward_impl.4} parent=0 // pred_region
    _
  $region9: #{_forward_impl.4} parent=0 // pred_fallthru
    _
  // Predicated region
  $region10: #{_forward_impl.4} parent=0 // pred_check
    _
  $region11: #{_forward_impl.4} parent=0 // pred_check_branch
    %14 = sbr.rel (0) target = $region13
  $region12: #{_forward_impl.4} parent=0 // pred_region
    _
  $region13: #{_forward_impl.4} parent=0 // pred_fallthru
    _
  // Predicated region
  $region14: #{_forward_impl.4} parent=0 // pred_check
    _
  $region15: #{_forward_impl.4} parent=0 // pred_check_branch
    %16 = sbr.rel (0) target = $region17
  $region16: #{_forward_impl.4} parent=0 // pred_region
    _
  $region17: #{_forward_impl.4} parent=0 // pred_fallthru
    _
  %v17 = vld [vmem:[%s3] sm:$0xff]
  %v18 = vld [vmem:[%s0] sm:$0xf]
  %v19 = vld [vmem:[%s0 + $0x4] sm:$0xf]
  %v20 = vld [vmem:[%s2] sm:$0xff]
  %v21 = vld [vmem:[%s2 + $0x8] sm:$0xff]
  %v22 = vld [vmem:[%s2 + $0x10] sm:$0xff]
  %v23 = vld [vmem:[%s2 + $0x18] sm:$0xff]
  %v24 = vld [vmem:[%s2 + $0x20] sm:$0xff]
  %v25 = vld [vmem:[%s2 + $0x28] sm:$0xff]
  %v26 = vld [vmem:[%s2 + $0x30] sm:$0xff]
  %v27 = vld [vmem:[%s2 + $0x38] sm:$0xff]
  %v28 = vld [vmem:[%s2 + $0x40] sm:$0xff]
  %v29 = vld [vmem:[%s2 + $0x48] sm:$0xff]
  %v30 = vld [vmem:[%s2 + $0x50] sm:$0xff]
  %v31 = vld [vmem:[%s2 + $0x58] sm:$0xff]
  %v32 = vld [vmem:[%s2 + $0x60] sm:$0xff]
  %v33 = vld [vmem:[%s2 + $0x68] sm:$0xff]
  %v34 = vld [vmem:[%s2 + $0x70] sm:$0xff]
  %v35 = vld [vmem:[%s2 + $0x78] sm:$0xff]
  %v36 = vld [vmem:[%s2 + $0x80] sm:$0xff]
  %v37 = vld [vmem:[%s2 + $0x88] sm:$0xff]
  %v38 = vld [vmem:[%s2 + $0x90] sm:$0xff]
  %v39 = vld [vmem:[%s2 + $0x98] sm:$0xff]
  %v40 = vld [vmem:[%s2 + $0xa0] sm:$0xff]
  %v41 = vld [vmem:[%s2 + $0xa8] sm:$0xff]
  %v42 = vld [vmem:[%s2 + $0xb0] sm:$0xff]
  %v43 = vld [vmem:[%s2 + $0xb8] sm:$0xff]
  %v44 = vld [vmem:[%s2 + $0xc0] sm:$0xff]
  %v45 = vld [vmem:[%s2 + $0xc8] sm:$0xff]
  %v46 = vld [vmem:[%s2 + $0xd0] sm:$0xff]
  %v47 = vld [vmem:[%s2 + $0xd8] sm:$0xff]
  %v48 = vld [vmem:[%s2 + $0xe0] sm:$0xff]
  %v49 = vld [vmem:[%s2 + $0xe8] sm:$0xff]
  %v50 = vld [vmem:[%s2 + $0xf0] sm:$0xff]
  %v51 = vld [vmem:[%s2 + $0xf8] sm:$0xff]
  %v52 = vld [vmem:[%s2 + $0x100] sm:$0xff]
  %v53 = vld [vmem:[%s2 + $0x108] sm:$0xff]
  %v54 = vld [vmem:[%s2 + $0x110] sm:$0xff]
  %v55 = vld [vmem:[%s2 + $0x118] sm:$0xff]
  %v56 = vld [vmem:[%s2 + $0x120] sm:$0xff]
  %v57 = vld [vmem:[%s2 + $0x128] sm:$0xff]
  %v58 = vld [vmem:[%s2 + $0x130] sm:$0xff]
  %v59 = vld [vmem:[%s2 + $0x138] sm:$0xff]
  %v60 = vld [vmem:[%s2 + $0x140] sm:$0xff]
  %v61 = vld [vmem:[%s2 + $0x148] sm:$0xff]
  %v62 = vld [vmem:[%s2 + $0x150] sm:$0xff]
  %v63 = vld [vmem:[%s2 + $0x158] sm:$0xff]
  %v64 = vld [vmem:[%s2 + $0x160] sm:$0xff]
  %v65 = vld [vmem:[%s2 + $0x168] sm:$0xff]
  %v66 = vld [vmem:[%s2 + $0x170] sm:$0xff]
  %v67 = vld [vmem:[%s2 + $0x178] sm:$0xff]
  %v68 = vld [vmem:[%s2 + $0x180] sm:$0xff]
  %v69 = vld [vmem:[%s2 + $0x188] sm:$0xff]
  %v70 = vld [vmem:[%s2 + $0x190] sm:$0xff]
  %v71 = vld [vmem:[%s2 + $0x198] sm:$0xff]
  %v72 = vld [vmem:[%s2 + $0x1a0] sm:$0xff]
  %v73 = vld [vmem:[%s2 + $0x1a8] sm:$0xff]
  %v74 = vld [vmem:[%s2 + $0x1b0] sm:$0xff]
  %v75 = vld [vmem:[%s2 + $0x1b8] sm:$0xff]
  %v76 = vld [vmem:[%s2 + $0x1c0] sm:$0xff]
  %v77 = vld [vmem:[%s2 + $0x1c8] sm:$0xff]
  %v78 = vld [vmem:[%s2 + $0x1d0] sm:$0xff]
  %v79 = vld [vmem:[%s2 + $0x1d8] sm:$0xff]
  %v80 = vld [vmem:[%s2 + $0x1e0] sm:$0xff]
  %v81 = vld [vmem:[%s2 + $0x1e8] sm:$0xff]
  %v82 = vld [vmem:[%s2 + $0x1f0] sm:$0xff]
  %v83 = vld [vmem:[%s2 + $0x1f8] sm:$0xff]
  %86 = vst [vmem:[#allocation1] ss:$9 sm:$0xff] %v18
  %s87 = scalar_lea.vmem [#allocation1], 1
  %88 = vst [vmem:[%s87] ss:$9 sm:$0xff] %v19
  %v89 = vld [vmem:[#allocation1] sm:$0xff]
  %v90 = vld [vmem:[#allocation1 + $0x9] sm:$0xff]
  %v91 = vld [vmem:[#allocation1 + $0x12] sm:$0xff]
  %v92 = vld [vmem:[#allocation1 + $0x1b] sm:$0xff]
  %97 = vmatpush.msra.mxu0 %v35
  %98 = vmatpush.msra.mxu0 %v34
  %99 = vmatpush.msra.mxu0 %v33
  %100 = vmatpush.msra.mxu0 %v32
  %101 = vmatpush.msra.mxu0 %v31
  %102 = vmatpush.msra.mxu0 %v30
  %103 = vmatpush.msra.mxu0 %v29
  %104 = vmatpush.msra.mxu0 %v28
  %105 = vmatpush.msra.mxu0 %v27
  %106 = vmatpush.msra.mxu0 %v26
  %107 = vmatpush.msra.mxu0 %v25
  %108 = vmatpush.msra.mxu0 %v24
  %109 = vmatpush.msra.mxu0 %v23
  %110 = vmatpush.msra.mxu0 %v22
  %111 = vmatpush.msra.mxu0 %v21
  %112 = vmatpush.msra.mxu0 %v20
  %113 = vmatmul.f32.gmra.mxu0 %v89
  %v114 = vpop.f32.mrf.mxu0
  %v115 = vadd.f32 0.0, %v114
  %116 = vdwg.mxu0
  %117 = vmatpush.msra.mxu0 %v51
  %118 = vmatpush.msra.mxu0 %v50
  %119 = vmatpush.msra.mxu0 %v49
  %120 = vmatpush.msra.mxu0 %v48
  %121 = vmatpush.msra.mxu0 %v47
  %122 = vmatpush.msra.mxu0 %v46
  %123 = vmatpush.msra.mxu0 %v45
  %124 = vmatpush.msra.mxu0 %v44
  %125 = vmatpush.msra.mxu0 %v43
  %126 = vmatpush.msra.mxu0 %v42
  %127 = vmatpush.msra.mxu0 %v41
  %128 = vmatpush.msra.mxu0 %v40
  %129 = vmatpush.msra.mxu0 %v39
  %130 = vmatpush.msra.mxu0 %v38
  %131 = vmatpush.msra.mxu0 %v37
  %132 = vmatpush.msra.mxu0 %v36
  %133 = vmatmul.f32.gmra.mxu0 %v90
  %v134 = vpop.f32.mrf.mxu0
  %v135 = vadd.f32 %v115, %v134
  %136 = vdwg.mxu0
  %137 = vmatpush.msra.mxu0 %v67
  %138 = vmatpush.msra.mxu0 %v66
  %139 = vmatpush.msra.mxu0 %v65
  %140 = vmatpush.msra.mxu0 %v64
  %141 = vmatpush.msra.mxu0 %v63
  %142 = vmatpush.msra.mxu0 %v62
  %143 = vmatpush.msra.mxu0 %v61
  %144 = vmatpush.msra.mxu0 %v60
  %145 = vmatpush.msra.mxu0 %v59
  %146 = vmatpush.msra.mxu0 %v58
  %147 = vmatpush.msra.mxu0 %v57
  %148 = vmatpush.msra.mxu0 %v56
  %149 = vmatpush.msra.mxu0 %v55
  %150 = vmatpush.msra.mxu0 %v54
  %151 = vmatpush.msra.mxu0 %v53
  %152 = vmatpush.msra.mxu0 %v52
  %153 = vmatmul.f32.gmra.mxu0 %v91
  %v154 = vpop.f32.mrf.mxu0
  %v155 = vadd.f32 %v135, %v154
  %156 = vdwg.mxu0
  %157 = vmatpush.msra.mxu0 %v83
  %158 = vmatpush.msra.mxu0 %v82
  %159 = vmatpush.msra.mxu0 %v81
  %160 = vmatpush.msra.mxu0 %v80
  %161 = vmatpush.msra.mxu0 %v79
  %162 = vmatpush.msra.mxu0 %v78
  %163 = vmatpush.msra.mxu0 %v77
  %164 = vmatpush.msra.mxu0 %v76
  %165 = vmatpush.msra.mxu0 %v75
  %166 = vmatpush.msra.mxu0 %v74
  %167 = vmatpush.msra.mxu0 %v73
  %168 = vmatpush.msra.mxu0 %v72
  %169 = vmatpush.msra.mxu0 %v71
  %170 = vmatpush.msra.mxu0 %v70
  %171 = vmatpush.msra.mxu0 %v69
  %172 = vmatpush.msra.mxu0 %v68
  %173 = vmatmul.f32.gmra.mxu0 %v92
  %v174 = vpop.f32.mrf.mxu0
  %v175 = vadd.f32 %v155, %v174
  %176 = vdwg.mxu0
  %v178 = vrot.slane %v175, 1
  %v180 = vadd.f32 %v175, %v17
  %v181 = vadd.f32 %v178, %v17
  %vm182 = vcmask 516096
  %183 = vst.msk [vmem:[%s4] sm:$0x1] %vm182, %v180
  %184 = vst.msk [vmem:[%s4 + $0x8] sm:$0x1] %vm182, %v181
  %v185 = vld [vmem:[%s1] sm:$0x7f]
  %v186 = vld [vmem:[%s1 + $0x8] sm:$0x7f]
  %v188 = vrot.slane %v17, 1
  %v190 = vadd.f32 %v185, %v188
  %v191 = vadd.f32 %v186, %v188
  %vm192 = vcmask 522240
  %193 = vst.msk [vmem:[%s4 + $0x1] sm:$0x7f] %vm192, %v190
  %194 = vst.msk [vmem:[%s4 + $0x9] sm:$0x7f] %vm192, %v191
  // Predicated region
  $region18: #{_forward_impl.4} parent=0 // pred_check
    _
  $region19: #{_forward_impl.4} parent=0 // pred_check_branch
    %196 = sbr.rel (0) target = $region21
  $region20: #{_forward_impl.4} parent=0 // pred_region
    _
  $region21: #{_forward_impl.4} parent=0 // pred_fallthru
    _
  // Predicated region
  $region22: #{_forward_impl.4} parent=0 // pred_check
    _
  $region23: #{_forward_impl.4} parent=0 // pred_check_branch
    %198 = sbr.rel (0) target = $region25
  $region24: #{_forward_impl.4} parent=0 // pred_region
    _
  $region25: #{_forward_impl.4} parent=0 // pred_fallthru
    _

// kernel: _forward_impl.5
$region0: #{_forward_impl.5}
  #allocation0 [shape = 'u32[]', space=smem, size = 0x4, offset = 0x4, fixed_abs, tag = 'smem constant byte address 0x4 - core index']
  #allocation1 [shape = 'u32[72,128]{1,0:T(1,128)}', space=vmem, size = 0x9000, scoped, tag = 'internal scratch']
  %s0 = inlined_call_operand.vmem [shape: f32[2,8,64], index: 0, kind: input, shape index: {}]
  %s1 = inlined_call_operand.vmem [shape: f32[1,64], index: 1, kind: input, shape index: {}]
  %s2 = inlined_call_operand.vmem [shape: f32[1,64], index: 2, kind: input, shape index: {}]
  %s3 = inlined_call_operand.vmem [shape: f32[64,192], index: 3, kind: input, shape index: {}]
  %s4 = inlined_call_operand.vmem [shape: f32[1,192], index: 4, kind: input, shape index: {}]
  %s5 = inlined_call_operand.vmem [shape: f32[64,64], index: 5, kind: input, shape index: {}]
  %s6 = inlined_call_operand.vmem [shape: f32[1,64], index: 6, kind: input, shape index: {}]
  %s7 = inlined_call_operand.vmem [shape: f32[1,64], index: 7, kind: input, shape index: {}]
  %s8 = inlined_call_operand.vmem [shape: f32[1,64], index: 8, kind: input, shape index: {}]
  %s9 = inlined_call_operand.vmem [shape: f32[64,256], index: 9, kind: input, shape index: {}]
  %s10 = inlined_call_operand.vmem [shape: f32[1,256], index: 10, kind: input, shape index: {}]
  %s11 = inlined_call_operand.vmem [shape: f32[256,64], index: 11, kind: input, shape index: {}]
  %s12 = inlined_call_operand.vmem [shape: f32[1,64], index: 12, kind: input, shape index: {}]
  %s13 = inlined_call_operand.vmem [shape: f32[2,8,64], index: 13, kind: output, shape index: {}]
  %s14 = sld [smem:[#allocation0]]
  $region62: #{_forward_impl.5} parent=0
    _
  %s16 = ssub.s32 1, %s14
  %s17 = scalar_select 0, %s16, %s14
  // Predicated region
  $region2: #{_forward_impl.5} parent=0 // pred_check
    _
  $region3: #{_forward_impl.5} parent=0 // pred_check_branch
    %19 = sbr.rel (0) target = $region5
  $region4: #{_forward_impl.5} parent=0 // pred_region
    _
  $region5: #{_forward_impl.5} parent=0 // pred_fallthru
    _
  // Predicated region
  $region6: #{_forward_impl.5} parent=0 // pred_check
    _
  $region7: #{_forward_impl.5} parent=0 // pred_check_branch
    %21 = sbr.rel (0) target = $region9
  $region8: #{_forward_impl.5} parent=0 // pred_region
    _
  $region9: #{_forward_impl.5} parent=0 // pred_fallthru
    _
  // Predicated region
  $region10: #{_forward_impl.5} parent=0 // pred_check
    _
  $region11: #{_forward_impl.5} parent=0 // pred_check_branch
    %23 = sbr.rel (0) target = $region13
  $region12: #{_forward_impl.5} parent=0 // pred_region
    _
  $region13: #{_forward_impl.5} parent=0 // pred_fallthru
    _
  // Predicated region
  $region14: #{_forward_impl.5} parent=0 // pred_check
    _
  $region15: #{_forward_impl.5} parent=0 // pred_check_branch
    %25 = sbr.rel (0) target = $region17
  $region16: #{_forward_impl.5} parent=0 // pred_region
    _
  $region17: #{_forward_impl.5} parent=0 // pred_fallthru
    _
  // Predicated region
  $region18: #{_forward_impl.5} parent=0 // pred_check
    _
  $region19: #{_forward_impl.5} parent=0 // pred_check_branch
    %27 = sbr.rel (0) target = $region21
  $region20: #{_forward_impl.5} parent=0 // pred_region
    _
  $region21: #{_forward_impl.5} parent=0 // pred_fallthru
    _
  // Predicated region
  $region22: #{_forward_impl.5} parent=0 // pred_check
    _
  $region23: #{_forward_impl.5} parent=0 // pred_check_branch
    %29 = sbr.rel (0) target = $region25
  $region24: #{_forward_impl.5} parent=0 // pred_region
    _
  $region25: #{_forward_impl.5} parent=0 // pred_fallthru
    _
  // Predicated region
  $region26: #{_forward_impl.5} parent=0 // pred_check
    _
  $region27: #{_forward_impl.5} parent=0 // pred_check_branch
    %31 = sbr.rel (0) target = $region29
  $region28: #{_forward_impl.5} parent=0 // pred_region
    _
  $region29: #{_forward_impl.5} parent=0 // pred_fallthru
    _
  // Predicated region
  $region30: #{_forward_impl.5} parent=0 // pred_check
    _
  $region31: #{_forward_impl.5} parent=0 // pred_check_branch
    %33 = sbr.rel (0) target = $region33
  $region32: #{_forward_impl.5} parent=0 // pred_region
    _
  $region33: #{_forward_impl.5} parent=0 // pred_fallthru
    _
  // Predicated region
  $region34: #{_forward_impl.5} parent=0 // pred_check
    _
  $region35: #{_forward_impl.5} parent=0 // pred_check_branch
    %35 = sbr.rel (0) target = $region37
  $region36: #{_forward_impl.5} parent=0 // pred_region
    _
  $region37: #{_forward_impl.5} parent=0 // pred_fallthru
    _
  // Predicated region
  $region38: #{_forward_impl.5} parent=0 // pred_check
    _
  $region39: #{_forward_impl.5} parent=0 // pred_check_branch
    %37 = sbr.rel (0) target = $region41
  $region40: #{_forward_impl.5} parent=0 // pred_region
    _
  $region41: #{_forward_impl.5} parent=0 // pred_fallthru
    _
  // Predicated region
  $region42: #{_forward_impl.5} parent=0 // pred_check
    _
  $region43: #{_forward_impl.5} parent=0 // pred_check_branch
    %39 = sbr.rel (0) target = $region45
  $region44: #{_forward_impl.5} parent=0 // pred_region
    _
  $region45: #{_forward_impl.5} parent=0 // pred_fallthru
    _
  // Predicated region
  $region46: #{_forward_impl.5} parent=0 // pred_check
    _
  $region47: #{_forward_impl.5} parent=0 // pred_check_branch
    %41 = sbr.rel (0) target = $region49
  $region48: #{_forward_impl.5} parent=0 // pred_region
    _
  $region49: #{_forward_impl.5} parent=0 // pred_fallthru
    _
  // Predicated region
  $region50: #{_forward_impl.5} parent=0 // pred_check
    _
  $region51: #{_forward_impl.5} parent=0 // pred_check_branch
    %43 = sbr.rel (0) target = $region53
  $region52: #{_forward_impl.5} parent=0 // pred_region
    _
  $region53: #{_forward_impl.5} parent=0 // pred_fallthru
    _
  %v44 = vld [vmem:[%s0] sm:$0xff]
  %v45 = vld [vmem:[%s0 + $0x8] sm:$0xff]
  %v46 = vld [vmem:[%s1] sm:$0x1]
  %v47 = vld [vmem:[%s2] sm:$0x1]
  %vm48 = vcmask 523264
  %v49 = vsel %vm48, %v44, 0.0
  %50 = vadd.xlane.f32.xlu0 %v49
  %v51 = vpop.xlane.xlu0 %50
  %v52 = vsel %vm48, %v45, 0.0
  %53 = vadd.xlane.f32.xlu0 %v52
  %v54 = vpop.xlane.xlu0 %53
  %v55 = vrcp.pop 64.0
  %v56 = vmul.f32 64.0, %v55
  %v57 = vsub.f32 1.0, %v56
  %v58 = vmul.f32 %v55, %v57
  %v59 = vadd.f32 %v55, %v58
  %vm60 = vweird.f32 %v55
  %v61 = vsel %vm60, %v55, %v59
  %v62 = vmul.f32 %v51, %v61
  %v63 = vmul.f32 %v54, %v61
  %v64 = vsub.f32 %v44, %v62
  %v65 = vsub.f32 %v45, %v63
  %v66 = vmul.f32 %v64, %v64
  %v67 = vmul.f32 %v65, %v65
  %v68 = vsel %vm48, %v66, 0.0
  %69 = vadd.xlane.f32.xlu0 %v68
  %v70 = vpop.xlane.xlu0 %69
  %v71 = vsel %vm48, %v67, 0.0
  %72 = vadd.xlane.f32.xlu0 %v71
  %v73 = vpop.xlane.xlu0 %72
  %v74 = vmul.f32 %v70, %v61
  %v75 = vmul.f32 %v73, %v61
  %v76 = vadd.f32 %v74, 1e-05
  %v77 = vadd.f32 %v75, 1e-05
  %v78 = vrsqrt.pop %v76
  %v79 = vmul.f32 %v78, %v76
  %v80 = vmul.f32 %v79, %v78
  %v81 = vmul.f32 0.5, %v80
  %v82 = vsub.f32 1.5, %v81
  %v83 = vmul.f32 %v78, %v82
  %vm84 = vweird.f32 %v76
  %vm85 = vweird.f32 %v78
  %vm86 = vmor %vm84, %vm85
  %v87 = vsel %vm86, %v78, %v83
  %v88 = vrsqrt.pop %v77
  %v89 = vmul.f32 %v88, %v77
  %v90 = vmul.f32 %v89, %v88
  %v91 = vmul.f32 0.5, %v90
  %v92 = vsub.f32 1.5, %v91
  %v93 = vmul.f32 %v88, %v92
  %vm94 = vweird.f32 %v77
  %vm95 = vweird.f32 %v88
  %vm96 = vmor %vm94, %vm95
  %v97 = vsel %vm96, %v88, %v93
  %v98 = vmul.f32 %v64, %v87
  %v99 = vmul.f32 %v65, %v97
  %v101 = vperm.slane %v46, 0
  %v103 = vmul.f32 %v98, %v101
  %v104 = vmul.f32 %v99, %v101
  %v106 = vperm.slane %v47, 0
  %v108 = vadd.f32 %v103, %v106
  %v109 = vadd.f32 %v104, %v106
  %v110 = vld [vmem:[%s3] sm:$0xff]
  %v111 = vld [vmem:[%s3 + $0x8] sm:$0xff]
  %v112 = vld [vmem:[%s3 + $0x10] sm:$0xff]
  %v113 = vld [vmem:[%s3 + $0x18] sm:$0xff]
  %v114 = vld [vmem:[%s3 + $0x20] sm:$0xff]
  %v115 = vld [vmem:[%s3 + $0x28] sm:$0xff]
  %v116 = vld [vmem:[%s3 + $0x30] sm:$0xff]
  %v117 = vld [vmem:[%s3 + $0x38] sm:$0xff]
  %v118 = vld [vmem:[%s3 + $0x40] sm:$0xff]
  %v119 = vld [vmem:[%s3 + $0x48] sm:$0xff]
  %v120 = vld [vmem:[%s3 + $0x50] sm:$0xff]
  %v121 = vld [vmem:[%s3 + $0x58] sm:$0xff]
  %v122 = vld [vmem:[%s3 + $0x60] sm:$0xff]
  %v123 = vld [vmem:[%s3 + $0x68] sm:$0xff]
  %v124 = vld [vmem:[%s3 + $0x70] sm:$0xff]
  %v125 = vld [vmem:[%s3 + $0x78] sm:$0xff]
  %v126 = vld [vmem:[%s4] sm:$0x3]
  %v128 = vperm.slane %v126, 0
  %v129 = vperm.slane %v126, 1
  %v133 = vsel %vm48, %v108, 0
  %v136 = vsel %vm48, %v109, 0
  %138 = vmatpush.msra.mxu0 0.0
  %139 = vmatpush.msra.mxu0 0.0
  %140 = vmatpush.msra.mxu0 0.0
  %141 = vmatpush.msra.mxu0 0.0
  %142 = vmatpush.msra.mxu0 0.0
  %143 = vmatpush.msra.mxu0 0.0
  %144 = vmatpush.msra.mxu0 0.0
  %145 = vmatpush.msra.mxu0 0.0
  %146 = vmatpush.msra.mxu0 %v124
  %147 = vmatpush.msra.mxu0 %v122
  %148 = vmatpush.msra.mxu0 %v120
  %149 = vmatpush.msra.mxu0 %v118
  %150 = vmatpush.msra.mxu0 %v116
  %151 = vmatpush.msra.mxu0 %v114
  %152 = vmatpush.msra.mxu0 %v112
  %153 = vmatpush.msra.mxu0 %v110
  %154 = vmatmul.f32.gmra.mxu0 %v133
  %v155 = vpop.f32.mrf.mxu0
  %v156 = vadd.f32 %v128, %v155
  %157 = vmatmul.f32.gmra.mxu0 %v136
  %v158 = vpop.f32.mrf.mxu0
  %v159 = vadd.f32 %v128, %v158
  %160 = vdwg.mxu0
  %161 = vmatpush.msra.mxu0 0.0
  %162 = vmatpush.msra.mxu0 0.0
  %163 = vmatpush.msra.mxu0 0.0
  %164 = vmatpush.msra.mxu0 0.0
  %165 = vmatpush.msra.mxu0 0.0
  %166 = vmatpush.msra.mxu0 0.0
  %167 = vmatpush.msra.mxu0 0.0
  %168 = vmatpush.msra.mxu0 0.0
  %169 = vmatpush.msra.mxu0 %v125
  %170 = vmatpush.msra.mxu0 %v123
  %171 = vmatpush.msra.mxu0 %v121
  %172 = vmatpush.msra.mxu0 %v119
  %173 = vmatpush.msra.mxu0 %v117
  %174 = vmatpush.msra.mxu0 %v115
  %175 = vmatpush.msra.mxu0 %v113
  %176 = vmatpush.msra.mxu0 %v111
  %177 = vmatmul.f32.gmra.mxu0 %v133
  %v178 = vpop.f32.mrf.mxu0
  %v179 = vadd.f32 %v129, %v178
  %180 = vmatmul.f32.gmra.mxu0 %v136
  %v181 = vpop.f32.mrf.mxu0
  %v182 = vadd.f32 %v129, %v181
  %183 = vdwg.mxu0
  %v184 = vlaneseq
  %v185 = vshrl.u32 %v184, 7
  %v186 = vlaneseq
  %v187 = vand.u32 %v186, 127
  %vm188 = vcmp.ge.s32.totalorder %v185, %v187
  %190 = vrot.lane.b32.xlu0 %v156, 64
  %v191 = vpop.permute.xlu0 %190
  %vm192 = vcmask 130048
  %v193 = vsel %vm192, %v156, 0
  %v195 = vsel %vm192, %v191, 0
  %197 = vmatpush.xpose.msra.mxu0 0.0
  %198 = vmatpush.xpose.msra.mxu0 0.0
  %199 = vmatpush.xpose.msra.mxu0 0.0
  %200 = vmatpush.xpose.msra.mxu0 0.0
  %201 = vmatpush.xpose.msra.mxu0 0.0
  %202 = vmatpush.xpose.msra.mxu0 0.0
  %203 = vmatpush.xpose.msra.mxu0 0.0
  %204 = vmatpush.xpose.msra.mxu0 0.0
  %205 = vmatpush.xpose.msra.mxu0 0.0
  %206 = vmatpush.xpose.msra.mxu0 0.0
  %207 = vmatpush.xpose.msra.mxu0 0.0
  %208 = vmatpush.xpose.msra.mxu0 0.0
  %209 = vmatpush.xpose.msra.mxu0 0.0
  %210 = vmatpush.xpose.msra.mxu0 0.0
  %211 = vmatpush.xpose.msra.mxu0 0.0
  %212 = vmatpush.xpose.msra.mxu0 %v195
  %213 = vmatmul.f32.gmra.mxu0 %v193
  %v214 = vpop.f32.mrf.mxu0
  %v215 = vadd.f32 0.0, %v214
  %216 = vdwg.mxu0
  %218 = vrot.lane.b32.xlu0 %v159, 64
  %v219 = vpop.permute.xlu0 %218
  %v220 = vsel %vm192, %v159, 0
  %v222 = vsel %vm192, %v219, 0
  %224 = vmatpush.xpose.msra.mxu0 0.0
  %225 = vmatpush.xpose.msra.mxu0 0.0
  %226 = vmatpush.xpose.msra.mxu0 0.0
  %227 = vmatpush.xpose.msra.mxu0 0.0
  %228 = vmatpush.xpose.msra.mxu0 0.0
  %229 = vmatpush.xpose.msra.mxu0 0.0
  %230 = vmatpush.xpose.msra.mxu0 0.0
  %231 = vmatpush.xpose.msra.mxu0 0.0
  %232 = vmatpush.xpose.msra.mxu0 0.0
  %233 = vmatpush.xpose.msra.mxu0 0.0
  %234 = vmatpush.xpose.msra.mxu0 0.0
  %235 = vmatpush.xpose.msra.mxu0 0.0
  %236 = vmatpush.xpose.msra.mxu0 0.0
  %237 = vmatpush.xpose.msra.mxu0 0.0
  %238 = vmatpush.xpose.msra.mxu0 0.0
  %239 = vmatpush.xpose.msra.mxu0 %v222
  %240 = vmatmul.f32.gmra.mxu0 %v220
  %v241 = vpop.f32.mrf.mxu0
  %v242 = vadd.f32 0.0, %v241
  %243 = vdwg.mxu0
  %v244 = vmul.f32 %v215, 0.25
  %v245 = vmul.f32 %v242, 0.25
  %v246 = vsel %vm188, 1, 0
  %vm247 = vcmp.eq.s32.totalorder %v246, 1
  %v248 = vsel %vm247, %v244, -1e+09
  %v249 = vsel %vm247, %v245, -1e+09
  %vm250 = vcmask 64512
  %v251 = vsel %vm250, %v248, -inf
  %252 = vmax.xlane.f32.xlu0 %v251
  %v253 = vpop.xlane.xlu0 %252
  %v254 = vsel %vm250, %v249, -inf
  %255 = vmax.xlane.f32.xlu0 %v254
  %v256 = vpop.xlane.xlu0 %255
  %v257 = vsub.f32 %v248, %v253
  %v258 = vsub.f32 %v249, %v256
  %v259 = vmul.f32 %v257, 1.442695
  %v260 = vpow.pop %v259
  %v261 = vmul.f32 %v258, 1.442695
  %v262 = vpow.pop %v261
  %v263 = vsel %vm250, %v260, 0.0
  %264 = vadd.xlane.f32.xlu0 %v263
  %v265 = vpop.xlane.xlu0 %264
  %v266 = vsel %vm250, %v262, 0.0
  %267 = vadd.xlane.f32.xlu0 %v266
  %v268 = vpop.xlane.xlu0 %267
  %v269 = vrcp.pop %v265
  %v270 = vrcp.pop %v268
  %v272 = vsel %vm250, %v260, 0
  %274 = vmatpush.msra.mxu0 0.0
  %275 = vmatpush.msra.mxu0 0.0
  %276 = vmatpush.msra.mxu0 0.0
  %277 = vmatpush.msra.mxu0 0.0
  %278 = vmatpush.msra.mxu0 0.0
  %279 = vmatpush.msra.mxu0 0.0
  %280 = vmatpush.msra.mxu0 0.0
  %281 = vmatpush.msra.mxu0 0.0
  %282 = vmatpush.msra.mxu0 0.0
  %283 = vmatpush.msra.mxu0 0.0
  %284 = vmatpush.msra.mxu0 0.0
  %285 = vmatpush.msra.mxu0 0.0
  %286 = vmatpush.msra.mxu0 0.0
  %287 = vmatpush.msra.mxu0 0.0
  %288 = vmatpush.msra.mxu0 0.0
  %289 = vmatpush.msra.mxu0 %v179
  %290 = vmatmul.f32.gmra.mxu0 %v272
  %v291 = vpop.f32.mrf.mxu0
  %v292 = vadd.f32 0.0, %v291
  %293 = vdwg.mxu0
  %v295 = vsel %vm250, %v262, 0
  %297 = vmatpush.msra.mxu0 0.0
  %298 = vmatpush.msra.mxu0 0.0
  %299 = vmatpush.msra.mxu0 0.0
  %300 = vmatpush.msra.mxu0 0.0
  %301 = vmatpush.msra.mxu0 0.0
  %302 = vmatpush.msra.mxu0 0.0
  %303 = vmatpush.msra.mxu0 0.0
  %304 = vmatpush.msra.mxu0 0.0
  %305 = vmatpush.msra.mxu0 0.0
  %306 = vmatpush.msra.mxu0 0.0
  %307 = vmatpush.msra.mxu0 0.0
  %308 = vmatpush.msra.mxu0 0.0
  %309 = vmatpush.msra.mxu0 0.0
  %310 = vmatpush.msra.mxu0 0.0
  %311 = vmatpush.msra.mxu0 0.0
  %312 = vmatpush.msra.mxu0 %v182
  %313 = vmatmul.f32.gmra.mxu0 %v295
  %v314 = vpop.f32.mrf.mxu0
  %v315 = vadd.f32 0.0, %v314
  %316 = vdwg.mxu0
  %v317 = vmul.f32 %v292, %v269
  %v318 = vmul.f32 %v315, %v270
  %319 = vrot.lane.b32.xlu0 %v156, 112
  %v320 = vpop.permute.xlu0 %319
  %321 = vrot.lane.b32.xlu0 %v156, 48
  %v322 = vpop.permute.xlu0 %321
  %v323 = vsel %vm192, %v320, 0
  %v325 = vsel %vm192, %v322, 0
  %327 = vmatpush.xpose.msra.mxu0 0.0
  %328 = vmatpush.xpose.msra.mxu0 0.0
  %329 = vmatpush.xpose.msra.mxu0 0.0
  %330 = vmatpush.xpose.msra.mxu0 0.0
  %331 = vmatpush.xpose.msra.mxu0 0.0
  %332 = vmatpush.xpose.msra.mxu0 0.0
  %333 = vmatpush.xpose.msra.mxu0 0.0
  %334 = vmatpush.xpose.msra.mxu0 0.0
  %335 = vmatpush.xpose.msra.mxu0 0.0
  %336 = vmatpush.xpose.msra.mxu0 0.0
  %337 = vmatpush.xpose.msra.mxu0 0.0
  %338 = vmatpush.xpose.msra.mxu0 0.0
  %339 = vmatpush.xpose.msra.mxu0 0.0
  %340 = vmatpush.xpose.msra.mxu0 0.0
  %341 = vmatpush.xpose.msra.mxu0 0.0
  %342 = vmatpush.xpose.msra.mxu0 %v325
  %343 = vmatmul.f32.gmra.mxu0 %v323
  %v344 = vpop.f32.mrf.mxu0
  %v345 = vadd.f32 0.0, %v344
  %346 = vdwg.mxu0
  %347 = vrot.lane.b32.xlu0 %v159, 112
  %v348 = vpop.permute.xlu0 %347
  %349 = vrot.lane.b32.xlu0 %v159, 48
  %v350 = vpop.permute.xlu0 %349
  %v351 = vsel %vm192, %v348, 0
  %v353 = vsel %vm192, %v350, 0
  %355 = vmatpush.xpose.msra.mxu0 0.0
  %356 = vmatpush.xpose.msra.mxu0 0.0
  %357 = vmatpush.xpose.msra.mxu0 0.0
  %358 = vmatpush.xpose.msra.mxu0 0.0
  %359 = vmatpush.xpose.msra.mxu0 0.0
  %360 = vmatpush.xpose.msra.mxu0 0.0
  %361 = vmatpush.xpose.msra.mxu0 0.0
  %362 = vmatpush.xpose.msra.mxu0 0.0
  %363 = vmatpush.xpose.msra.mxu0 0.0
  %364 = vmatpush.xpose.msra.mxu0 0.0
  %365 = vmatpush.xpose.msra.mxu0 0.0
  %366 = vmatpush.xpose.msra.mxu0 0.0
  %367 = vmatpush.xpose.msra.mxu0 0.0
  %368 = vmatpush.xpose.msra.mxu0 0.0
  %369 = vmatpush.xpose.msra.mxu0 0.0
  %370 = vmatpush.xpose.msra.mxu0 %v353
  %371 = vmatmul.f32.gmra.mxu0 %v351
  %v372 = vpop.f32.mrf.mxu0
  %v373 = vadd.f32 0.0, %v372
  %374 = vdwg.mxu0
  %v375 = vmul.f32 %v345, 0.25
  %v376 = vmul.f32 %v373, 0.25
  %v377 = vsel %vm247, %v375, -1e+09
  %v378 = vsel %vm247, %v376, -1e+09
  %v379 = vsel %vm250, %v377, -inf
  %380 = vmax.xlane.f32.xlu0 %v379
  %v381 = vpop.xlane.xlu0 %380
  %v382 = vsel %vm250, %v378, -inf
  %383 = vmax.xlane.f32.xlu0 %v382
  %v384 = vpop.xlane.xlu0 %383
  %v385 = vsub.f32 %v377, %v381
  %v386 = vsub.f32 %v378, %v384
  %v387 = vmul.f32 %v385, 1.442695
  %v388 = vpow.pop %v387
  %v389 = vmul.f32 %v386, 1.442695
  %v390 = vpow.pop %v389
  %v391 = vsel %vm250, %v388, 0.0
  %392 = vadd.xlane.f32.xlu0 %v391
  %v393 = vpop.xlane.xlu0 %392
  %v394 = vsel %vm250, %v390, 0.0
  %395 = vadd.xlane.f32.xlu0 %v394
  %v396 = vpop.xlane.xlu0 %395
  %v397 = vrcp.pop %v393
  %v398 = vrcp.pop %v396
  %400 = vrot.lane.b32.xlu0 %v179, 112
  %v401 = vpop.permute.xlu0 %400
  %v404 = vsel %vm250, %v388, 0
  %406 = vmatpush.msra.mxu0 0.0
  %407 = vmatpush.msra.mxu0 0.0
  %408 = vmatpush.msra.mxu0 0.0
  %409 = vmatpush.msra.mxu0 0.0
  %410 = vmatpush.msra.mxu0 0.0
  %411 = vmatpush.msra.mxu0 0.0
  %412 = vmatpush.msra.mxu0 0.0
  %413 = vmatpush.msra.mxu0 0.0
  %414 = vmatpush.msra.mxu0 0.0
  %415 = vmatpush.msra.mxu0 0.0
  %416 = vmatpush.msra.mxu0 0.0
  %417 = vmatpush.msra.mxu0 0.0
  %418 = vmatpush.msra.mxu0 0.0
  %419 = vmatpush.msra.mxu0 0.0
  %420 = vmatpush.msra.mxu0 0.0
  %421 = vmatpush.msra.mxu0 %v401
  %422 = vmatmul.f32.gmra.mxu0 %v404
  %v423 = vpop.f32.mrf.mxu0
  %v424 = vadd.f32 0.0, %v423
  %425 = vdwg.mxu0
  %427 = vrot.lane.b32.xlu0 %v182, 112
  %v428 = vpop.permute.xlu0 %427
  %v431 = vsel %vm250, %v390, 0
  %433 = vmatpush.msra.mxu0 0.0
  %434 = vmatpush.msra.mxu0 0.0
  %435 = vmatpush.msra.mxu0 0.0
  %436 = vmatpush.msra.mxu0 0.0
  %437 = vmatpush.msra.mxu0 0.0
  %438 = vmatpush.msra.mxu0 0.0
  %439 = vmatpush.msra.mxu0 0.0
  %440 = vmatpush.msra.mxu0 0.0
  %441 = vmatpush.msra.mxu0 0.0
  %442 = vmatpush.msra.mxu0 0.0
  %443 = vmatpush.msra.mxu0 0.0
  %444 = vmatpush.msra.mxu0 0.0
  %445 = vmatpush.msra.mxu0 0.0
  %446 = vmatpush.msra.mxu0 0.0
  %447 = vmatpush.msra.mxu0 0.0
  %448 = vmatpush.msra.mxu0 %v428
  %449 = vmatmul.f32.gmra.mxu0 %v431
  %v450 = vpop.f32.mrf.mxu0
  %v451 = vadd.f32 0.0, %v450
  %452 = vdwg.mxu0
  %v453 = vmul.f32 %v424, %v397
  %v454 = vmul.f32 %v451, %v398
  %455 = vrot.lane.b32.xlu0 %v156, 96
  %v456 = vpop.permute.xlu0 %455
  %457 = vrot.lane.b32.xlu0 %v156, 32
  %v458 = vpop.permute.xlu0 %457
  %v459 = vsel %vm192, %v456, 0
  %v461 = vsel %vm192, %v458, 0
  %463 = vmatpush.xpose.msra.mxu0 0.0
  %464 = vmatpush.xpose.msra.mxu0 0.0
  %465 = vmatpush.xpose.msra.mxu0 0.0
  %466 = vmatpush.xpose.msra.mxu0 0.0
  %467 = vmatpush.xpose.msra.mxu0 0.0
  %468 = vmatpush.xpose.msra.mxu0 0.0
  %469 = vmatpush.xpose.msra.mxu0 0.0
  %470 = vmatpush.xpose.msra.mxu0 0.0
  %471 = vmatpush.xpose.msra.mxu0 0.0
  %472 = vmatpush.xpose.msra.mxu0 0.0
  %473 = vmatpush.xpose.msra.mxu0 0.0
  %474 = vmatpush.xpose.msra.mxu0 0.0
  %475 = vmatpush.xpose.msra.mxu0 0.0
  %476 = vmatpush.xpose.msra.mxu0 0.0
  %477 = vmatpush.xpose.msra.mxu0 0.0
  %478 = vmatpush.xpose.msra.mxu0 %v461
  %479 = vmatmul.f32.gmra.mxu0 %v459
  %v480 = vpop.f32.mrf.mxu0
  %v481 = vadd.f32 0.0, %v480
  %482 = vdwg.mxu0
  %483 = vrot.lane.b32.xlu0 %v159, 96
  %v484 = vpop.permute.xlu0 %483
  %485 = vrot.lane.b32.xlu0 %v159, 32
  %v486 = vpop.permute.xlu0 %485
  %v487 = vsel %vm192, %v484, 0
  %v489 = vsel %vm192, %v486, 0
  %491 = vmatpush.xpose.msra.mxu0 0.0
  %492 = vmatpush.xpose.msra.mxu0 0.0
  %493 = vmatpush.xpose.msra.mxu0 0.0
  %494 = vmatpush.xpose.msra.mxu0 0.0
  %495 = vmatpush.xpose.msra.mxu0 0.0
  %496 = vmatpush.xpose.msra.mxu0 0.0
  %497 = vmatpush.xpose.msra.mxu0 0.0
  %498 = vmatpush.xpose.msra.mxu0 0.0
  %499 = vmatpush.xpose.msra.mxu0 0.0
  %500 = vmatpush.xpose.msra.mxu0 0.0
  %501 = vmatpush.xpose.msra.mxu0 0.0
  %502 = vmatpush.xpose.msra.mxu0 0.0
  %503 = vmatpush.xpose.msra.mxu0 0.0
  %504 = vmatpush.xpose.msra.mxu0 0.0
  %505 = vmatpush.xpose.msra.mxu0 0.0
  %506 = vmatpush.xpose.msra.mxu0 %v489
  %507 = vmatmul.f32.gmra.mxu0 %v487
  %v508 = vpop.f32.mrf.mxu0
  %v509 = vadd.f32 0.0, %v508
  %510 = vdwg.mxu0
  %v511 = vmul.f32 %v481, 0.25
  %v512 = vmul.f32 %v509, 0.25
  %v513 = vsel %vm247, %v511, -1e+09
  %v514 = vsel %vm247, %v512, -1e+09
  %v515 = vsel %vm250, %v513, -inf
  %516 = vmax.xlane.f32.xlu0 %v515
  %v517 = vpop.xlane.xlu0 %516
  %v518 = vsel %vm250, %v514, -inf
  %519 = vmax.xlane.f32.xlu0 %v518
  %v520 = vpop.xlane.xlu0 %519
  %v521 = vsub.f32 %v513, %v517
  %v522 = vsub.f32 %v514, %v520
  %v523 = vmul.f32 %v521, 1.442695
  %v524 = vpow.pop %v523
  %v525 = vmul.f32 %v522, 1.442695
  %v526 = vpow.pop %v525
  %v527 = vsel %vm250, %v524, 0.0
  %528 = vadd.xlane.f32.xlu0 %v527
  %v529 = vpop.xlane.xlu0 %528
  %v530 = vsel %vm250, %v526, 0.0
  %531 = vadd.xlane.f32.xlu0 %v530
  %v532 = vpop.xlane.xlu0 %531
  %v533 = vrcp.pop %v529
  %v534 = vrcp.pop %v532
  %535 = vrot.lane.b32.xlu0 %v179, 96
  %v536 = vpop.permute.xlu0 %535
  %v539 = vsel %vm250, %v524, 0
  %541 = vmatpush.msra.mxu0 0.0
  %542 = vmatpush.msra.mxu0 0.0
  %543 = vmatpush.msra.mxu0 0.0
  %544 = vmatpush.msra.mxu0 0.0
  %545 = vmatpush.msra.mxu0 0.0
  %546 = vmatpush.msra.mxu0 0.0
  %547 = vmatpush.msra.mxu0 0.0
  %548 = vmatpush.msra.mxu0 0.0
  %549 = vmatpush.msra.mxu0 0.0
  %550 = vmatpush.msra.mxu0 0.0
  %551 = vmatpush.msra.mxu0 0.0
  %552 = vmatpush.msra.mxu0 0.0
  %553 = vmatpush.msra.mxu0 0.0
  %554 = vmatpush.msra.mxu0 0.0
  %555 = vmatpush.msra.mxu0 0.0
  %556 = vmatpush.msra.mxu0 %v536
  %557 = vmatmul.f32.gmra.mxu0 %v539
  %v558 = vpop.f32.mrf.mxu0
  %v559 = vadd.f32 0.0, %v558
  %560 = vdwg.mxu0
  %561 = vrot.lane.b32.xlu0 %v182, 96
  %v562 = vpop.permute.xlu0 %561
  %v565 = vsel %vm250, %v526, 0
  %567 = vmatpush.msra.mxu0 0.0
  %568 = vmatpush.msra.mxu0 0.0
  %569 = vmatpush.msra.mxu0 0.0
  %570 = vmatpush.msra.mxu0 0.0
  %571 = vmatpush.msra.mxu0 0.0
  %572 = vmatpush.msra.mxu0 0.0
  %573 = vmatpush.msra.mxu0 0.0
  %574 = vmatpush.msra.mxu0 0.0
  %575 = vmatpush.msra.mxu0 0.0
  %576 = vmatpush.msra.mxu0 0.0
  %577 = vmatpush.msra.mxu0 0.0
  %578 = vmatpush.msra.mxu0 0.0
  %579 = vmatpush.msra.mxu0 0.0
  %580 = vmatpush.msra.mxu0 0.0
  %581 = vmatpush.msra.mxu0 0.0
  %582 = vmatpush.msra.mxu0 %v562
  %583 = vmatmul.f32.gmra.mxu0 %v565
  %v584 = vpop.f32.mrf.mxu0
  %v585 = vadd.f32 0.0, %v584
  %586 = vdwg.mxu0
  %v587 = vmul.f32 %v559, %v533
  %v588 = vmul.f32 %v585, %v534
  %589 = vrot.lane.b32.xlu0 %v156, 80
  %v590 = vpop.permute.xlu0 %589
  %591 = vrot.lane.b32.xlu0 %v156, 16
  %v592 = vpop.permute.xlu0 %591
  %v593 = vsel %vm192, %v590, 0
  %v595 = vsel %vm192, %v592, 0
  %597 = vmatpush.xpose.msra.mxu0 0.0
  %598 = vmatpush.xpose.msra.mxu0 0.0
  %599 = vmatpush.xpose.msra.mxu0 0.0
  %600 = vmatpush.xpose.msra.mxu0 0.0
  %601 = vmatpush.xpose.msra.mxu0 0.0
  %602 = vmatpush.xpose.msra.mxu0 0.0
  %603 = vmatpush.xpose.msra.mxu0 0.0
  %604 = vmatpush.xpose.msra.mxu0 0.0
  %605 = vmatpush.xpose.msra.mxu0 0.0
  %606 = vmatpush.xpose.msra.mxu0 0.0
  %607 = vmatpush.xpose.msra.mxu0 0.0
  %608 = vmatpush.xpose.msra.mxu0 0.0
  %609 = vmatpush.xpose.msra.mxu0 0.0
  %610 = vmatpush.xpose.msra.mxu0 0.0
  %611 = vmatpush.xpose.msra.mxu0 0.0
  %612 = vmatpush.xpose.msra.mxu0 %v595
  %613 = vmatmul.f32.gmra.mxu0 %v593
  %v614 = vpop.f32.mrf.mxu0
  %v615 = vadd.f32 0.0, %v614
  %616 = vdwg.mxu0
  %617 = vrot.lane.b32.xlu0 %v159, 80
  %v618 = vpop.permute.xlu0 %617
  %619 = vrot.lane.b32.xlu0 %v159, 16
  %v620 = vpop.permute.xlu0 %619
  %v621 = vsel %vm192, %v618, 0
  %v623 = vsel %vm192, %v620, 0
  %625 = vmatpush.xpose.msra.mxu0 0.0
  %626 = vmatpush.xpose.msra.mxu0 0.0
  %627 = vmatpush.xpose.msra.mxu0 0.0
  %628 = vmatpush.xpose.msra.mxu0 0.0
  %629 = vmatpush.xpose.msra.mxu0 0.0
  %630 = vmatpush.xpose.msra.mxu0 0.0
  %631 = vmatpush.xpose.msra.mxu0 0.0
  %632 = vmatpush.xpose.msra.mxu0 0.0
  %633 = vmatpush.xpose.msra.mxu0 0.0
  %634 = vmatpush.xpose.msra.mxu0 0.0
  %635 = vmatpush.xpose.msra.mxu0 0.0
  %636 = vmatpush.xpose.msra.mxu0 0.0
  %637 = vmatpush.xpose.msra.mxu0 0.0
  %638 = vmatpush.xpose.msra.mxu0 0.0
  %639 = vmatpush.xpose.msra.mxu0 0.0
  %640 = vmatpush.xpose.msra.mxu0 %v623
  %641 = vmatmul.f32.gmra.mxu0 %v621
  %v642 = vpop.f32.mrf.mxu0
  %v643 = vadd.f32 0.0, %v642
  %644 = vdwg.mxu0
  %v645 = vmul.f32 %v615, 0.25
  %v646 = vmul.f32 %v643, 0.25
  %v647 = vsel %vm247, %v645, -1e+09
  %v648 = vsel %vm247, %v646, -1e+09
  %v649 = vsel %vm250, %v647, -inf
  %650 = vmax.xlane.f32.xlu0 %v649
  %v651 = vpop.xlane.xlu0 %650
  %v652 = vsel %vm250, %v648, -inf
  %653 = vmax.xlane.f32.xlu0 %v652
  %v654 = vpop.xlane.xlu0 %653
  %v655 = vsub.f32 %v647, %v651
  %v656 = vsub.f32 %v648, %v654
  %v657 = vmul.f32 %v655, 1.442695
  %v658 = vpow.pop %v657
  %v659 = vmul.f32 %v656, 1.442695
  %v660 = vpow.pop %v659
  %v661 = vsel %vm250, %v658, 0.0
  %662 = vadd.xlane.f32.xlu0 %v661
  %v663 = vpop.xlane.xlu0 %662
  %v664 = vsel %vm250, %v660, 0.0
  %665 = vadd.xlane.f32.xlu0 %v664
  %v666 = vpop.xlane.xlu0 %665
  %v667 = vrcp.pop %v663
  %v668 = vrcp.pop %v666
  %669 = vrot.lane.b32.xlu0 %v179, 80
  %v670 = vpop.permute.xlu0 %669
  %v673 = vsel %vm250, %v658, 0
  %675 = vmatpush.msra.mxu0 0.0
  %676 = vmatpush.msra.mxu0 0.0
  %677 = vmatpush.msra.mxu0 0.0
  %678 = vmatpush.msra.mxu0 0.0
  %679 = vmatpush.msra.mxu0 0.0
  %680 = vmatpush.msra.mxu0 0.0
  %681 = vmatpush.msra.mxu0 0.0
  %682 = vmatpush.msra.mxu0 0.0
  %683 = vmatpush.msra.mxu0 0.0
  %684 = vmatpush.msra.mxu0 0.0
  %685 = vmatpush.msra.mxu0 0.0
  %686 = vmatpush.msra.mxu0 0.0
  %687 = vmatpush.msra.mxu0 0.0
  %688 = vmatpush.msra.mxu0 0.0
  %689 = vmatpush.msra.mxu0 0.0
  %690 = vmatpush.msra.mxu0 %v670
  %691 = vmatmul.f32.gmra.mxu0 %v673
  %v692 = vpop.f32.mrf.mxu0
  %v693 = vadd.f32 0.0, %v692
  %694 = vdwg.mxu0
  %695 = vrot.lane.b32.xlu0 %v182, 80
  %v696 = vpop.permute.xlu0 %695
  %v699 = vsel %vm250, %v660, 0
  %701 = vmatpush.msra.mxu0 0.0
  %702 = vmatpush.msra.mxu0 0.0
  %703 = vmatpush.msra.mxu0 0.0
  %704 = vmatpush.msra.mxu0 0.0
  %705 = vmatpush.msra.mxu0 0.0
  %706 = vmatpush.msra.mxu0 0.0
  %707 = vmatpush.msra.mxu0 0.0
  %708 = vmatpush.msra.mxu0 0.0
  %709 = vmatpush.msra.mxu0 0.0
  %710 = vmatpush.msra.mxu0 0.0
  %711 = vmatpush.msra.mxu0 0.0
  %712 = vmatpush.msra.mxu0 0.0
  %713 = vmatpush.msra.mxu0 0.0
  %714 = vmatpush.msra.mxu0 0.0
  %715 = vmatpush.msra.mxu0 0.0
  %716 = vmatpush.msra.mxu0 %v696
  %717 = vmatmul.f32.gmra.mxu0 %v699
  %v718 = vpop.f32.mrf.mxu0
  %v719 = vadd.f32 0.0, %v718
  %720 = vdwg.mxu0
  %v721 = vmul.f32 %v693, %v667
  %v722 = vmul.f32 %v719, %v668
  %725 = vrot.lane.b32.xlu0 %v453, 16
  %v726 = vpop.permute.xlu0 %725
  %727 = vrot.lane.b32.xlu0 %v454, 16
  %v728 = vpop.permute.xlu0 %727
  %733 = vrot.lane.b32.xlu0 %v587, 32
  %v734 = vpop.permute.xlu0 %733
  %735 = vrot.lane.b32.xlu0 %v588, 32
  %v736 = vpop.permute.xlu0 %735
  %741 = vrot.lane.b32.xlu0 %v721, 48
  %v742 = vpop.permute.xlu0 %741
  %743 = vrot.lane.b32.xlu0 %v722, 48
  %v744 = vpop.permute.xlu0 %743
  %v747 = vsel %vm192, %v317, %v726
  %v748 = vsel %vm192, %v318, %v728
  %vm749 = vcmask 261120
  %v750 = vsel %vm749, %v747, %v734
  %v751 = vsel %vm749, %v748, %v736
  %vm752 = vcmask 392192
  %v753 = vsel %vm752, %v750, %v742
  %v754 = vsel %vm752, %v751, %v744
  %v755 = vld [vmem:[%s5] sm:$0xff]
  %v756 = vld [vmem:[%s5 + $0x8] sm:$0xff]
  %v757 = vld [vmem:[%s5 + $0x10] sm:$0xff]
  %v758 = vld [vmem:[%s5 + $0x18] sm:$0xff]
  %v759 = vld [vmem:[%s5 + $0x20] sm:$0xff]
  %v760 = vld [vmem:[%s5 + $0x28] sm:$0xff]
  %v761 = vld [vmem:[%s5 + $0x30] sm:$0xff]
  %v762 = vld [vmem:[%s5 + $0x38] sm:$0xff]
  %v764 = vsel %vm48, %v753, 0
  %v767 = vsel %vm48, %v754, 0
  %769 = vmatpush.msra.mxu0 0.0
  %770 = vmatpush.msra.mxu0 0.0
  %771 = vmatpush.msra.mxu0 0.0
  %772 = vmatpush.msra.mxu0 0.0
  %773 = vmatpush.msra.mxu0 0.0
  %774 = vmatpush.msra.mxu0 0.0
  %775 = vmatpush.msra.mxu0 0.0
  %776 = vmatpush.msra.mxu0 0.0
  %777 = vmatpush.msra.mxu0 %v762
  %778 = vmatpush.msra.mxu0 %v761
  %779 = vmatpush.msra.mxu0 %v760
  %780 = vmatpush.msra.mxu0 %v759
  %781 = vmatpush.msra.mxu0 %v758
  %782 = vmatpush.msra.mxu0 %v757
  %783 = vmatpush.msra.mxu0 %v756
  %784 = vmatpush.msra.mxu0 %v755
  %785 = vmatmul.f32.gmra.mxu0 %v764
  %v786 = vpop.f32.mrf.mxu0
  %v787 = vadd.f32 0.0, %v786
  %788 = vmatmul.f32.gmra.mxu0 %v767
  %v789 = vpop.f32.mrf.mxu0
  %v790 = vadd.f32 0.0, %v789
  %791 = vdwg.mxu0
  %v792 = vadd.f32 %v44, %v787
  %v793 = vadd.f32 %v45, %v790
  %v794 = vld [vmem:[%s6] sm:$0x1]
  %v796 = vperm.slane %v794, 0
  %v798 = vadd.f32 %v792, %v796
  %v799 = vadd.f32 %v793, %v796
  %v800 = vld [vmem:[%s7] sm:$0x1]
  %v801 = vld [vmem:[%s8] sm:$0x1]
  %v802 = vsel %vm48, %v798, 0.0
  %803 = vadd.xlane.f32.xlu0 %v802
  %v804 = vpop.xlane.xlu0 %803
  %v805 = vsel %vm48, %v799, 0.0
  %806 = vadd.xlane.f32.xlu0 %v805
  %v807 = vpop.xlane.xlu0 %806
  %v808 = vmul.f32 %v804, %v61
  %v809 = vmul.f32 %v807, %v61
  %v810 = vsub.f32 %v798, %v808
  %v811 = vsub.f32 %v799, %v809
  %v812 = vmul.f32 %v810, %v810
  %v813 = vmul.f32 %v811, %v811
  %v814 = vsel %vm48, %v812, 0.0
  %815 = vadd.xlane.f32.xlu0 %v814
  %v816 = vpop.xlane.xlu0 %815
  %v817 = vsel %vm48, %v813, 0.0
  %818 = vadd.xlane.f32.xlu0 %v817
  %v819 = vpop.xlane.xlu0 %818
  %v820 = vmul.f32 %v816, %v61
  %v821 = vmul.f32 %v819, %v61
  %v822 = vadd.f32 %v820, 1e-05
  %v823 = vadd.f32 %v821, 1e-05
  %v824 = vrsqrt.pop %v822
  %v825 = vmul.f32 %v824, %v822
  %v826 = vmul.f32 %v825, %v824
  %v827 = vmul.f32 0.5, %v826
  %v828 = vsub.f32 1.5, %v827
  %v829 = vmul.f32 %v824, %v828
  %vm830 = vweird.f32 %v822
  %vm831 = vweird.f32 %v824
  %vm832 = vmor %vm830, %vm831
  %v833 = vsel %vm832, %v824, %v829
  %v834 = vrsqrt.pop %v823
  %v835 = vmul.f32 %v834, %v823
  %v836 = vmul.f32 %v835, %v834
  %v837 = vmul.f32 0.5, %v836
  %v838 = vsub.f32 1.5, %v837
  %v839 = vmul.f32 %v834, %v838
  %vm840 = vweird.f32 %v823
  %vm841 = vweird.f32 %v834
  %vm842 = vmor %vm840, %vm841
  %v843 = vsel %vm842, %v834, %v839
  %v844 = vmul.f32 %v810, %v833
  %v845 = vmul.f32 %v811, %v843
  %v847 = vperm.slane %v800, 0
  %v849 = vmul.f32 %v844, %v847
  %v850 = vmul.f32 %v845, %v847
  %v852 = vperm.slane %v801, 0
  %v854 = vadd.f32 %v849, %v852
  %v855 = vadd.f32 %v850, %v852
  %v856 = vld [vmem:[%s9] sm:$0xff]
  %v857 = vld [vmem:[%s9 + $0x8] sm:$0xff]
  %v858 = vld [vmem:[%s9 + $0x10] sm:$0xff]
  %v859 = vld [vmem:[%s9 + $0x18] sm:$0xff]
  %v860 = vld [vmem:[%s9 + $0x20] sm:$0xff]
  %v861 = vld [vmem:[%s9 + $0x28] sm:$0xff]
  %v862 = vld [vmem:[%s9 + $0x30] sm:$0xff]
  %v863 = vld [vmem:[%s9 + $0x38] sm:$0xff]
  %v864 = vld [vmem:[%s9 + $0x40] sm:$0xff]
  %v865 = vld [vmem:[%s9 + $0x48] sm:$0xff]
  %v866 = vld [vmem:[%s9 + $0x50] sm:$0xff]
  %v867 = vld [vmem:[%s9 + $0x58] sm:$0xff]
  %v868 = vld [vmem:[%s9 + $0x60] sm:$0xff]
  %v869 = vld [vmem:[%s9 + $0x68] sm:$0xff]
  %v870 = vld [vmem:[%s9 + $0x70] sm:$0xff]
  %v871 = vld [vmem:[%s9 + $0x78] sm:$0xff]
  %v872 = vld [vmem:[%s10] sm:$0x3]
  %v874 = vperm.slane %v872, 0
  %v875 = vperm.slane %v872, 1
  %v879 = vsel %vm48, %v854, 0
  %v882 = vsel %vm48, %v855, 0
  %884 = vmatpush.msra.mxu0 0.0
  %885 = vmatpush.msra.mxu0 0.0
  %886 = vmatpush.msra.mxu0 0.0
  %887 = vmatpush.msra.mxu0 0.0
  %888 = vmatpush.msra.mxu0 0.0
  %889 = vmatpush.msra.mxu0 0.0
  %890 = vmatpush.msra.mxu0 0.0
  %891 = vmatpush.msra.mxu0 0.0
  %892 = vmatpush.msra.mxu0 %v870
  %893 = vmatpush.msra.mxu0 %v868
  %894 = vmatpush.msra.mxu0 %v866
  %895 = vmatpush.msra.mxu0 %v864
  %896 = vmatpush.msra.mxu0 %v862
  %897 = vmatpush.msra.mxu0 %v860
  %898 = vmatpush.msra.mxu0 %v858
  %899 = vmatpush.msra.mxu0 %v856
  %900 = vmatmul.f32.gmra.mxu0 %v879
  %v901 = vpop.f32.mrf.mxu0
  %v902 = vadd.f32 %v874, %v901
  %903 = vmatmul.f32.gmra.mxu0 %v882
  %v904 = vpop.f32.mrf.mxu0
  %v905 = vadd.f32 %v874, %v904
  %906 = vdwg.mxu0
  %907 = vmatpush.msra.mxu0 0.0
  %908 = vmatpush.msra.mxu0 0.0
  %909 = vmatpush.msra.mxu0 0.0
  %910 = vmatpush.msra.mxu0 0.0
  %911 = vmatpush.msra.mxu0 0.0
  %912 = vmatpush.msra.mxu0 0.0
  %913 = vmatpush.msra.mxu0 0.0
  %914 = vmatpush.msra.mxu0 0.0
  %915 = vmatpush.msra.mxu0 %v871
  %916 = vmatpush.msra.mxu0 %v869
  %917 = vmatpush.msra.mxu0 %v867
  %918 = vmatpush.msra.mxu0 %v865
  %919 = vmatpush.msra.mxu0 %v863
  %920 = vmatpush.msra.mxu0 %v861
  %921 = vmatpush.msra.mxu0 %v859
  %922 = vmatpush.msra.mxu0 %v857
  %923 = vmatmul.f32.gmra.mxu0 %v879
  %v924 = vpop.f32.mrf.mxu0
  %v925 = vadd.f32 %v875, %v924
  %926 = vmatmul.f32.gmra.mxu0 %v882
  %v927 = vpop.f32.mrf.mxu0
  %v928 = vadd.f32 %v875, %v927
  %929 = vdwg.mxu0
  %v930 = vmul.f32 %v902, 0.5
  %v931 = vmul.f32 %v925, 0.5
  %v932 = vmul.f32 %v905, 0.5
  %v933 = vmul.f32 %v928, 0.5
  %v934 = vmul.f32 %v902, 0.044715
  %v935 = vmul.f32 %v925, 0.044715
  %v936 = vmul.f32 %v905, 0.044715
  %v937 = vmul.f32 %v928, 0.044715
  %v938 = vmul.f32 %v934, %v902
  %v939 = vmul.f32 %v935, %v925
  %v940 = vmul.f32 %v936, %v905
  %v941 = vmul.f32 %v937, %v928
  %v942 = vmul.f32 %v938, %v902
  %v943 = vmul.f32 %v939, %v925
  %v944 = vmul.f32 %v940, %v905
  %v945 = vmul.f32 %v941, %v928
  %v946 = vadd.f32 %v902, %v942
  %v947 = vadd.f32 %v925, %v943
  %v948 = vadd.f32 %v905, %v944
  %v949 = vadd.f32 %v928, %v945
  %v950 = vmul.f32 %v946, 0.7978846
  %v951 = vmul.f32 %v947, 0.7978846
  %v952 = vmul.f32 %v948, 0.7978846
  %v953 = vmul.f32 %v949, 0.7978846
  %v954 = vtanh.pop %v950
  %v955 = vtanh.pop %v951
  %v956 = vtanh.pop %v952
  %v957 = vtanh.pop %v953
  %v958 = vadd.f32 %v954, 1.0
  %v959 = vadd.f32 %v955, 1.0
  %v960 = vadd.f32 %v956, 1.0
  %v961 = vadd.f32 %v957, 1.0
  %v962 = vmul.f32 %v930, %v958
  %v963 = vmul.f32 %v931, %v959
  %v964 = vmul.f32 %v932, %v960
  %v965 = vmul.f32 %v933, %v961
  %v966 = vld [vmem:[%s11] sm:$0xff]
  %v967 = vld [vmem:[%s11 + $0x8] sm:$0xff]
  %v968 = vld [vmem:[%s11 + $0x10] sm:$0xff]
  %v969 = vld [vmem:[%s11 + $0x18] sm:$0xff]
  %v970 = vld [vmem:[%s11 + $0x20] sm:$0xff]
  %v971 = vld [vmem:[%s11 + $0x28] sm:$0xff]
  %v972 = vld [vmem:[%s11 + $0x30] sm:$0xff]
  %v973 = vld [vmem:[%s11 + $0x38] sm:$0xff]
  %v974 = vld [vmem:[%s11 + $0x40] sm:$0xff]
  %v975 = vld [vmem:[%s11 + $0x48] sm:$0xff]
  %v976 = vld [vmem:[%s11 + $0x50] sm:$0xff]
  %v977 = vld [vmem:[%s11 + $0x58] sm:$0xff]
  %v978 = vld [vmem:[%s11 + $0x60] sm:$0xff]
  %v979 = vld [vmem:[%s11 + $0x68] sm:$0xff]
  %v980 = vld [vmem:[%s11 + $0x70] sm:$0xff]
  %v981 = vld [vmem:[%s11 + $0x78] sm:$0xff]
  %v982 = vld [vmem:[%s11 + $0x80] sm:$0xff]
  %v983 = vld [vmem:[%s11 + $0x88] sm:$0xff]
  %v984 = vld [vmem:[%s11 + $0x90] sm:$0xff]
  %v985 = vld [vmem:[%s11 + $0x98] sm:$0xff]
  %v986 = vld [vmem:[%s11 + $0xa0] sm:$0xff]
  %v987 = vld [vmem:[%s11 + $0xa8] sm:$0xff]
  %v988 = vld [vmem:[%s11 + $0xb0] sm:$0xff]
  %v989 = vld [vmem:[%s11 + $0xb8] sm:$0xff]
  %v990 = vld [vmem:[%s11 + $0xc0] sm:$0xff]
  %v991 = vld [vmem:[%s11 + $0xc8] sm:$0xff]
  %v992 = vld [vmem:[%s11 + $0xd0] sm:$0xff]
  %v993 = vld [vmem:[%s11 + $0xd8] sm:$0xff]
  %v994 = vld [vmem:[%s11 + $0xe0] sm:$0xff]
  %v995 = vld [vmem:[%s11 + $0xe8] sm:$0xff]
  %v996 = vld [vmem:[%s11 + $0xf0] sm:$0xff]
  %v997 = vld [vmem:[%s11 + $0xf8] sm:$0xff]
  %v998 = vld [vmem:[%s12] sm:$0x1]
  %v1000 = vperm.slane %v998, 0
  %1002 = vmatpush.msra.mxu0 %v981
  %1003 = vmatpush.msra.mxu0 %v980
  %1004 = vmatpush.msra.mxu0 %v979
  %1005 = vmatpush.msra.mxu0 %v978
  %1006 = vmatpush.msra.mxu0 %v977
  %1007 = vmatpush.msra.mxu0 %v976
  %1008 = vmatpush.msra.mxu0 %v975
  %1009 = vmatpush.msra.mxu0 %v974
  %1010 = vmatpush.msra.mxu0 %v973
  %1011 = vmatpush.msra.mxu0 %v972
  %1012 = vmatpush.msra.mxu0 %v971
  %1013 = vmatpush.msra.mxu0 %v970
  %1014 = vmatpush.msra.mxu0 %v969
  %1015 = vmatpush.msra.mxu0 %v968
  %1016 = vmatpush.msra.mxu0 %v967
  %1017 = vmatpush.msra.mxu0 %v966
  %1018 = vmatmul.f32.gmra.mxu0 %v962
  %v1019 = vpop.f32.mrf.mxu0
  %v1020 = vadd.f32 %v1000, %v1019
  %1021 = vmatmul.f32.gmra.mxu0 %v964
  %v1022 = vpop.f32.mrf.mxu0
  %v1023 = vadd.f32 %v1000, %v1022
  %1024 = vdwg.mxu0
  %1025 = vmatpush.msra.mxu0 %v997
  %1026 = vmatpush.msra.mxu0 %v996
  %1027 = vmatpush.msra.mxu0 %v995
  %1028 = vmatpush.msra.mxu0 %v994
  %1029 = vmatpush.msra.mxu0 %v993
  %1030 = vmatpush.msra.mxu0 %v992
  %1031 = vmatpush.msra.mxu0 %v991
  %1032 = vmatpush.msra.mxu0 %v990
  %1033 = vmatpush.msra.mxu0 %v989
  %1034 = vmatpush.msra.mxu0 %v988
  %1035 = vmatpush.msra.mxu0 %v987
  %1036 = vmatpush.msra.mxu0 %v986
  %1037 = vmatpush.msra.mxu0 %v985
  %1038 = vmatpush.msra.mxu0 %v984
  %1039 = vmatpush.msra.mxu0 %v983
  %1040 = vmatpush.msra.mxu0 %v982
  %1041 = vmatmul.f32.gmra.mxu0 %v963
  %v1042 = vpop.f32.mrf.mxu0
  %v1043 = vadd.f32 %v1020, %v1042
  %1044 = vmatmul.f32.gmra.mxu0 %v965
  %v1045 = vpop.f32.mrf.mxu0
  %v1046 = vadd.f32 %v1023, %v1045
  %1047 = vdwg.mxu0
  %v1048 = vadd.f32 %v798, %v1043
  %v1049 = vadd.f32 %v799, %v1046
  %1050 = vst.msk [vmem:[%s13] sm:$0xff] %vm48, %v1048
  %1051 = vst.msk [vmem:[%s13 + $0x8] sm:$0xff] %vm48, %v1049
  // Predicated region
  $region54: #{_forward_impl.5} parent=0 // pred_check
    _
  $region55: #{_forward_impl.5} parent=0 // pred_check_branch
    %1053 = sbr.rel (0) target = $region57
  $region56: #{_forward_impl.5} parent=0 // pred_region
    _
  $region57: #{_forward_impl.5} parent=0 // pred_fallthru
    _
  // Predicated region
  $region58: #{_forward_impl.5} parent=0 // pred_check
    _
  $region59: #{_forward_impl.5} parent=0 // pred_check_branch
    %1055 = sbr.rel (0) target = $region61
  $region60: #{_forward_impl.5} parent=0 // pred_region
    _
  $region61: #{_forward_impl.5} parent=0 // pred_fallthru
    _

</llo_original>
